<compile_context>
chip_gen: v6e
topology: v6e:2x2x1
jax: 0.10.0
libtpu: 0.0.40
codegen_flags: <defaults>
</compile_context>

<pallas_src>
import functools

import jax
import jax.numpy as jnp
from jax.experimental import pallas as pl
from jax.experimental.pallas import tpu as pltpu


def _dice_kernel(seg_ref, tgt_ref, objw_ref,
                 w1_ref, b1_ref, w2_ref, b2_ref, w3_ref, b3_ref,
                 out_i_ref, out_s_ref, out_t_ref,
                 acc_i_ref, acc_s_ref, acc_t_ref,
                 *, width, npt_per_split):
    s = pl.program_id(0)      # spatial split (v7x dual-core balance)
    pt = pl.program_id(2)     # spatial tile within the split
    npt = pl.num_programs(2)

    TP = seg_ref.shape[2]

    @pl.when(pt == 0)
    def _init():
        acc_i_ref[...] = jnp.zeros_like(acc_i_ref)
        acc_s_ref[...] = jnp.zeros_like(acc_s_ref)
        acc_t_ref[...] = jnp.zeros_like(acc_t_ref)

    seg = seg_ref[0].astype(jnp.float32)      # [C,   TP]  spatial on lanes
    tgt = tgt_ref[0].astype(jnp.float32)      # [K,   TP]
    w1 = w1_ref[0]                            # [K*C, C+2]
    b1 = b1_ref[0]                            # [K*C, 1]   (center offsets absorbed)
    w2 = w2_ref[0]                            # [K*C, K*C] block-diagonal
    b2 = b2_ref[0]                            # [K*C, 1]
    w3 = w3_ref[0]                            # [K,   K*C] block-diagonal
    b3 = b3_ref[0]                            # [K,   1]

    # Pixel coordinates of this spatial tile (flattened row-major over (H, W)).
    # Float floor-division is exact for the magnitudes involved (P < 2^24).
    wf = jnp.float32(width)
    p0 = (s * npt_per_split + pt) * TP
    cols = (jax.lax.broadcasted_iota(jnp.int32, (1, TP), 1) + p0).astype(jnp.float32)
    yg = jnp.floor(cols / wf)                       # [1, TP]
    xg = cols - yg * wf                             # [1, TP]
    inv128 = jnp.float32(1.0 / 128.0)

    # Object-independent RHS: [seg channels ; x/128 ; y/128]  -> [C+2, TP].
    rhs = jnp.concatenate([seg, xg * inv128, yg * inv128], axis=0)

    # Layer 1: one flat MXU matmul; per-object center offsets live in b1.
    h = jnp.dot(w1, rhs, preferred_element_type=jnp.float32) + b1
    h = jnp.maximum(h, 0.0)
    # Layer 2: block-diagonal grouped conv as a single matmul.
    h = jnp.dot(w2, h, preferred_element_type=jnp.float32) + b2
    h = jnp.maximum(h, 0.0)
    # Layer 3 + sigmoid (transcendental -> EUP slot).
    logit = jnp.dot(w3, h, preferred_element_type=jnp.float32) + b3   # [K, TP]
    pred = jax.nn.sigmoid(logit)

    # Per-object dice partial sums for this spatial tile.
    acc_i_ref[...] += jnp.sum(pred * tgt, axis=1, keepdims=True)
    acc_s_ref[...] += jnp.sum(pred * pred, axis=1, keepdims=True)
    acc_t_ref[...] += jnp.sum(tgt * tgt, axis=1, keepdims=True)

    @pl.when(pt == npt - 1)
    def _finalize():
        # obj_w = mask[b, k] * (k < num_obj); masks are 0/1 so one multiply is
        # exact (mirrors weight[:num_obj] slicing + true_mask multiply).
        obj_w = objw_ref[0]                                           # [K, 1]
        out_i_ref[...] = jnp.broadcast_to(jnp.sum(acc_i_ref[...] * obj_w),
                                          (1, 1, 1, 1))
        out_s_ref[...] = jnp.broadcast_to(jnp.sum(acc_s_ref[...] * obj_w),
                                          (1, 1, 1, 1))
        out_t_ref[...] = jnp.broadcast_to(jnp.sum(acc_t_ref[...] * obj_w),
                                          (1, 1, 1, 1))


def _pick_spatial_tile(p, cap=2048, full_tile_limit=8192):
    """Full P if small enough; else largest multiple of 128 dividing P, <= cap."""
    if p <= full_tile_limit:
        return p
    if p % 128 != 0:
        return p
    t = (min(cap, p) // 128) * 128
    while t >= 128:
        if p % t == 0:
            return t
        t -= 128
    return p


def dice_loss_forward(seg_feat, conv_weight, mask, ind, target, seg_mask,
                      feat_channel, tile_cap=2048, full_tile_limit=8192):
    """JAX/Pallas forward of DiceLoss.

    seg_feat:    [B, C, H, W]
    conv_weight: [B, Wt, H, W] with Wt = (C+2)*C + C + C*C + C + C + 1
    mask:        [B, K]   (0/1 object flags, prefix-packed: first num_obj set)
    ind:         [B, K]   flattened spatial indices
    target:      [B, K, H, W]  per-object GT masks
    seg_mask:    [B, K]   (0/1 mask-annotation flags)
    """
    f32 = jnp.float32
    B, C, H, W = seg_feat.shape
    assert C == feat_channel
    P = H * W
    K = ind.shape[1]
    Wt = (C + 2) * C + C + C * C + C + C + 1
    assert conv_weight.shape == (B, Wt, H, W)
    assert target.shape == (B, K, H, W)
    KC = K * C

    # Keep the big spatial streams in their native dtype (cast inside the
    # kernel after the VMEM load) to minimize HBM traffic.
    seg = seg_feat.reshape(B, C, P)
    tgt = target.reshape(B, K, P)
    if seg.dtype == jnp.bool_:
        seg = seg.astype(f32)
    if tgt.dtype == jnp.bool_:
        tgt = tgt.astype(jnp.uint8)

    ind_i = ind.astype(jnp.int32)
    num_obj = jnp.sum(mask.astype(jnp.int32), axis=1)
    num_anno = jnp.sum(seg_mask.astype(jnp.int32), axis=1)

    # Object weight = mask[b,k] * (k < num_obj) (prefix-packed mask assumption).
    kidx = jnp.arange(K, dtype=jnp.int32)[None, :]
    obj_w = (mask.astype(f32) * (kidx < num_obj[:, None]).astype(f32)
             ).reshape(B, K, 1)

    # _transpose_and_gather_feat(conv_weight, ind): gather B*K weight vectors
    # (tiny), then split into per-layer tensors.
    cw = conv_weight.reshape(B, Wt, P).astype(f32)
    idx = jnp.broadcast_to(ind_i[:, None, :], (B, Wt, K))
    wk = jnp.transpose(jnp.take_along_axis(cw, idx, axis=2), (0, 2, 1))  # [B,K,Wt]

    o = 0
    w1 = wk[..., o:o + (C + 2) * C].reshape(B, K, C, C + 2); o += (C + 2) * C
    b1 = wk[..., o:o + C].reshape(B, K, C); o += C
    w2 = wk[..., o:o + C * C].reshape(B, K, C, C); o += C * C
    b2 = wk[..., o:o + C].reshape(B, K, C); o += C
    w3 = wk[..., o:o + C].reshape(B, K, C); o += C
    b3 = wk[..., o:o + 1].reshape(B, K, 1); o += 1

    # Object centers with integer ops (old-PyTorch ind / w == floor division).
    xk = (ind_i % W).astype(f32)[:, :, None]          # [B, K, 1]
    yk = (ind_i // W).astype(f32)[:, :, None]         # [B, K, 1]
    w1x = w1[..., C]                                  # [B, K, C]
    w1y = w1[..., C + 1]                              # [B, K, C]
    # Absorb the per-object center offsets into the layer-1 bias.
    b1_eff = (b1 - (w1x * xk + w1y * yk) * (1.0 / 128.0)).reshape(B, KC, 1)
    w1_full = w1.reshape(B, KC, C + 2)                # [seg cols | x col | y col]

    # Block-diagonal layer-2 / layer-3 weights (zeros pad into the MXU for free).
    eye_k = jnp.eye(K, dtype=f32)
    w2_bd = (w2[:, :, :, None, :] * eye_k[None, :, None, :, None]
             ).reshape(B, KC, KC)
    b2_f = b2.reshape(B, KC, 1)
    w3_bd = (w3[:, :, None, :] * eye_k[None, :, :, None]).reshape(B, K, KC)

    # Spatial tiling / dual-core split of the reduction range.
    TP = _pick_spatial_tile(P, tile_cap, full_tile_limit)
    npt = P // TP
    nsplit = 2 if (npt >= 2 and npt % 2 == 0) else 1
    npt_ps = npt // nsplit
    grid = (nsplit, B, npt_ps)

    spatial_map = lambda s, b, pt: (b, 0, s * npt_ps + pt)
    per_b = lambda s, b, pt: (b, 0, 0)
    out_map = lambda s, b, pt: (s, b, 0, 0)

    in_specs = [
        pl.BlockSpec((1, C, TP), spatial_map),        # seg
        pl.BlockSpec((1, K, TP), spatial_map),        # target
        pl.BlockSpec((1, K, 1), per_b),               # obj_w
        pl.BlockSpec((1, KC, C + 2), per_b),          # w1 (flat)
        pl.BlockSpec((1, KC, 1), per_b),              # b1_eff
        pl.BlockSpec((1, KC, KC), per_b),             # w2 block-diag
        pl.BlockSpec((1, KC, 1), per_b),              # b2
        pl.BlockSpec((1, K, KC), per_b),              # w3 block-diag
        pl.BlockSpec((1, K, 1), per_b),               # b3
    ]
    out_specs = [pl.BlockSpec((1, 1, 1, 1), out_map)] * 3
    out_shape = [jax.ShapeDtypeStruct((nsplit, B, 1, 1), f32)] * 3

    parts_i, parts_s, parts_t = pl.pallas_call(
        functools.partial(_dice_kernel, width=W, npt_per_split=npt_ps),
        out_shape=out_shape,
        grid_spec=pltpu.PrefetchScalarGridSpec(
            num_scalar_prefetch=0,
            grid=grid,
            in_specs=in_specs,
            out_specs=out_specs,
            scratch_shapes=[
                pltpu.VMEM((K, 1), jnp.float32),   # sum(pred * tgt)
                pltpu.VMEM((K, 1), jnp.float32),   # sum(pred * pred)
                pltpu.VMEM((K, 1), jnp.float32),   # sum(tgt * tgt)
            ]),
        compiler_params=pltpu.CompilerParams(
            dimension_semantics=("parallel", "parallel", "arbitrary")),
    )(seg, tgt, obj_w, w1_full, b1_eff, w2_bd, b2_f, w3_bd, b3)

    # Final dice combine in the wrapper (sums over the spatial splits).
    inter = jnp.sum(parts_i, axis=0)[:, 0, 0]
    s_i = jnp.sum(parts_s, axis=0)[:, 0, 0]
    s_t = jnp.sum(parts_t, axis=0)[:, 0, 0]
    dice = 1.0 - (2.0 * inter + 1.0) / (s_i + s_t + 1.0)
    valid = jnp.logical_and(num_obj > 0, num_anno > 0)
    return jnp.sum(jnp.where(valid, dice, 0.0)) / B


def _reference_forward(seg_feat, conv_weight, mask, ind, target, seg_mask, C):
    """Pure-JAX reference of the PyTorch forward (independent code path)."""
    f32 = jnp.float32
    B, _, H, W = seg_feat.shape
    P = H * W
    Wt = conv_weight.shape[1]
    cw = conv_weight.reshape(B, Wt, P).astype(f32)
    yg, xg = jnp.meshgrid(jnp.arange(H, dtype=f32), jnp.arange(W, dtype=f32),
                          indexing="ij")
    total = jnp.float32(0.0)
    for i in range(B):
        num_obj = int(jnp.sum(mask[i]))
        num_anno = int(jnp.sum(seg_mask[i]))
        if num_obj == 0 or num_anno == 0:
            continue
        inter = jnp.float32(0.0)
        s_i = jnp.float32(0.0)
        s_t = jnp.float32(0.0)
        for k in range(num_obj):
            wv = cw[i, :, int(ind[i, k])]
            o = 0
            w1 = wv[o:o + (C + 2) * C].reshape(C, C + 2); o += (C + 2) * C
            b1 = wv[o:o + C]; o += C
            w2 = wv[o:o + C * C].reshape(C, C); o += C * C
            b2 = wv[o:o + C]; o += C
            w3 = wv[o:o + C]; o += C
            b3 = wv[o]
            xk = int(ind[i, k]) % W
            yk = int(ind[i, k]) // W
            feat = jnp.concatenate(
                [seg_feat[i].astype(f32),
                 ((xg - xk) / 128.0)[None],
                 ((yg - yk) / 128.0)[None]], axis=0)
            h = jnp.maximum(jnp.einsum("od,dhw->ohw", w1, feat)
                            + b1[:, None, None], 0.0)
            h = jnp.maximum(jnp.einsum("od,dhw->ohw", w2, h)
                            + b2[:, None, None], 0.0)
            pr = jax.nn.sigmoid(jnp.einsum("d,dhw->hw", w3, h) + b3)
            m = jnp.float32(mask[i, k])
            ifl = pr * m
            tfl = target[i, k].astype(f32) * m
            inter = inter + jnp.sum(ifl * tfl)
            s_i = s_i + jnp.sum(ifl * ifl)
            s_t = s_t + jnp.sum(tfl * tfl)
        total = total + (1.0 - (2.0 * inter + 1.0) / (s_i + s_t + 1.0))
    return total / B


if __name__ == "__main__":
    B, C, H, W, K = 3, 4, 32, 32, 8
    Wt = (C + 2) * C + C + C * C + C + C + 1

    key = jax.random.PRNGKey(0)
    k1, k2, k3, k4 = jax.random.split(key, 4)

    seg_feat = jax.random.normal(k1, (B, C, H, W), dtype=jnp.float32)
    conv_weight = 0.5 * jax.random.normal(k2, (B, Wt, H, W), dtype=jnp.float32)
    ind = jax.random.randint(k3, (B, K), 0, H * W, dtype=jnp.int32)
    target = (jax.random.uniform(k4, (B, K, H, W)) > 0.5).astype(jnp.float32)

    # Canonical CenterNet layout: first num_obj entries valid (third batch has
    # zero objects to exercise the "skip" branch).
    n_obj = jnp.array([5, 3, 0], dtype=jnp.int32)
    n_anno = jnp.array([4, 2, 0], dtype=jnp.int32)
    ar = jnp.arange(K, dtype=jnp.int32)[None, :]
    mask = (ar < n_obj[:, None]).astype(jnp.float32)
    seg_mask = (ar < n_anno[:, None]).astype(jnp.float32)

    ref = _reference_forward(seg_feat, conv_weight, mask, ind, target, seg_mask, C)

    # Default config: single full-P spatial tile per batch.
    loss = dice_loss_forward(seg_feat, conv_weight, mask, ind, target, seg_mask,
                             feat_channel=C)
    loss = jax.block_until_ready(loss)
    assert jnp.allclose(loss, ref, rtol=1e-3, atol=1e-3), (loss, ref)

    # Forced multi-tile + spatial-split config (exercises the accumulator and
    # dual-core-split paths used at real CenterNet sizes, e.g. H=W=128).
    loss2 = dice_loss_forward(seg_feat, conv_weight, mask, ind, target, seg_mask,
                              feat_channel=C, tile_cap=256, full_tile_limit=0)
    loss2 = jax.block_until_ready(loss2)
    assert jnp.allclose(loss2, ref, rtol=1e-3, atol=1e-3), (loss2, ref)

    print("KERNEL_OK")
</pallas_src>

<mosaic_0001>
module attributes {stable_mosaic.version = 11 : i64} {
  func.func @_dice_kernel(%arg0: i32, %arg1: i32, %arg2: i32, %arg3: memref<1x4x1024xf32, #tpu.memory_space<vmem>>, %arg4: memref<1x8x1024xf32, #tpu.memory_space<vmem>>, %arg5: memref<1x8x1xf32, #tpu.memory_space<vmem>>, %arg6: memref<1x32x6xf32, #tpu.memory_space<vmem>>, %arg7: memref<1x32x1xf32, #tpu.memory_space<vmem>>, %arg8: memref<1x32x32xf32, #tpu.memory_space<vmem>>, %arg9: memref<1x32x1xf32, #tpu.memory_space<vmem>>, %arg10: memref<1x8x32xf32, #tpu.memory_space<vmem>>, %arg11: memref<1x8x1xf32, #tpu.memory_space<vmem>>, %arg12: memref<1x1x1x1xf32, #tpu.memory_space<vmem>>, %arg13: memref<1x1x1x1xf32, #tpu.memory_space<vmem>>, %arg14: memref<1x1x1x1xf32, #tpu.memory_space<vmem>>, %arg15: memref<8x1xf32, #tpu.memory_space<vmem>>, %arg16: memref<8x1xf32, #tpu.memory_space<vmem>>, %arg17: memref<8x1xf32, #tpu.memory_space<vmem>>) attributes {dimension_semantics = [#tpu.dimension_semantics<parallel>, #tpu.dimension_semantics<parallel>, #tpu.dimension_semantics<arbitrary>], iteration_bounds = array<i64: 1, 3, 1>, scalar_prefetch = 0 : i64, scratch_operands = 3 : i64, tpu.core_type = #tpu.core_type<tc>, window_params = [{transform_indices = @transform_0, window_bounds = array<i64: 1, 4, 1024>}, {transform_indices = @transform_1, window_bounds = array<i64: 1, 8, 1024>}, {transform_indices = @transform_2, window_bounds = array<i64: 1, 8, 1>}, {transform_indices = @transform_3, window_bounds = array<i64: 1, 32, 6>}, {transform_indices = @transform_4, window_bounds = array<i64: 1, 32, 1>}, {transform_indices = @transform_5, window_bounds = array<i64: 1, 32, 32>}, {transform_indices = @transform_6, window_bounds = array<i64: 1, 32, 1>}, {transform_indices = @transform_7, window_bounds = array<i64: 1, 8, 32>}, {transform_indices = @transform_8, window_bounds = array<i64: 1, 8, 1>}, {transform_indices = @transform_9, window_bounds = array<i64: 1, 1, 1, 1>}, {transform_indices = @transform_10, window_bounds = array<i64: 1, 1, 1, 1>}, {transform_indices = @transform_11, window_bounds = array<i64: 1, 1, 1, 1>}]} {
    %c0_i32 = arith.constant 0 : i32
    %0 = arith.cmpi eq, %arg2, %c0_i32 : i32
    %1 = arith.extui %0 : i1 to i32
    %c0_i32_0 = arith.constant 0 : i32
    %2 = arith.cmpi ne, %1, %c0_i32_0 : i32
    scf.if %2 {
      %cst_50 = arith.constant 0.000000e+00 : f32
      %76 = vector.broadcast %cst_50 : f32 to vector<8x1xf32>
      %c0_51 = arith.constant 0 : index
      %c0_52 = arith.constant 0 : index
      %77 = vector.load %arg15[%c0_51, %c0_52] : memref<8x1xf32, #tpu.memory_space<vmem>>, vector<8x1xf32>
      tpu.vector_store %arg15[%c0_51, %c0_52], %76 {strides = array<i32>} : memref<8x1xf32, #tpu.memory_space<vmem>>, vector<8x1xf32>,
      %cst_53 = arith.constant 0.000000e+00 : f32
      %78 = vector.broadcast %cst_53 : f32 to vector<8x1xf32>
      %c0_54 = arith.constant 0 : index
      %c0_55 = arith.constant 0 : index
      %79 = vector.load %arg16[%c0_54, %c0_55] : memref<8x1xf32, #tpu.memory_space<vmem>>, vector<8x1xf32>
      tpu.vector_store %arg16[%c0_54, %c0_55], %78 {strides = array<i32>} : memref<8x1xf32, #tpu.memory_space<vmem>>, vector<8x1xf32>,
      %cst_56 = arith.constant 0.000000e+00 : f32
      %80 = vector.broadcast %cst_56 : f32 to vector<8x1xf32>
      %c0_57 = arith.constant 0 : index
      %c0_58 = arith.constant 0 : index
      %81 = vector.load %arg17[%c0_57, %c0_58] : memref<8x1xf32, #tpu.memory_space<vmem>>, vector<8x1xf32>
      tpu.vector_store %arg17[%c0_57, %c0_58], %80 {strides = array<i32>} : memref<8x1xf32, #tpu.memory_space<vmem>>, vector<8x1xf32>,
    } else {
    }
    %c0 = arith.constant 0 : index
    %c0_1 = arith.constant 0 : index
    %c0_2 = arith.constant 0 : index
    %3 = vector.load %arg3[%c0, %c0_1, %c0_2] : memref<1x4x1024xf32, #tpu.memory_space<vmem>>, vector<1x4x1024xf32>
    %4 = vector.shape_cast %3 : vector<1x4x1024xf32> to vector<4x1024xf32>
    %c0_3 = arith.constant 0 : index
    %c0_4 = arith.constant 0 : index
    %c0_5 = arith.constant 0 : index
    %5 = vector.load %arg4[%c0_3, %c0_4, %c0_5] : memref<1x8x1024xf32, #tpu.memory_space<vmem>>, vector<1x8x1024xf32>
    %6 = vector.shape_cast %5 : vector<1x8x1024xf32> to vector<8x1024xf32>
    %c0_6 = arith.constant 0 : index
    %c0_7 = arith.constant 0 : index
    %c0_8 = arith.constant 0 : index
    %7 = vector.load %arg6[%c0_6, %c0_7, %c0_8] : memref<1x32x6xf32, #tpu.memory_space<vmem>>, vector<1x32x6xf32>
    %8 = vector.shape_cast %7 : vector<1x32x6xf32> to vector<32x6xf32>
    %c0_9 = arith.constant 0 : index
    %c0_10 = arith.constant 0 : index
    %c0_11 = arith.constant 0 : index
    %9 = vector.load %arg7[%c0_9, %c0_10, %c0_11] : memref<1x32x1xf32, #tpu.memory_space<vmem>>, vector<1x32x1xf32>
    %10 = vector.shape_cast %9 : vector<1x32x1xf32> to vector<32x1xf32>
    %c0_12 = arith.constant 0 : index
    %c0_13 = arith.constant 0 : index
    %c0_14 = arith.constant 0 : index
    %11 = vector.load %arg8[%c0_12, %c0_13, %c0_14] : memref<1x32x32xf32, #tpu.memory_space<vmem>>, vector<1x32x32xf32>
    %12 = vector.shape_cast %11 : vector<1x32x32xf32> to vector<32x32xf32>
    %c0_15 = arith.constant 0 : index
    %c0_16 = arith.constant 0 : index
    %c0_17 = arith.constant 0 : index
    %13 = vector.load %arg9[%c0_15, %c0_16, %c0_17] : memref<1x32x1xf32, #tpu.memory_space<vmem>>, vector<1x32x1xf32>
    %14 = vector.shape_cast %13 : vector<1x32x1xf32> to vector<32x1xf32>
    %c0_18 = arith.constant 0 : index
    %c0_19 = arith.constant 0 : index
    %c0_20 = arith.constant 0 : index
    %15 = vector.load %arg10[%c0_18, %c0_19, %c0_20] : memref<1x8x32xf32, #tpu.memory_space<vmem>>, vector<1x8x32xf32>
    %16 = vector.shape_cast %15 : vector<1x8x32xf32> to vector<8x32xf32>
    %c0_21 = arith.constant 0 : index
    %c0_22 = arith.constant 0 : index
    %c0_23 = arith.constant 0 : index
    %17 = vector.load %arg11[%c0_21, %c0_22, %c0_23] : memref<1x8x1xf32, #tpu.memory_space<vmem>>, vector<1x8x1xf32>
    %18 = vector.shape_cast %17 : vector<1x8x1xf32> to vector<8x1xf32>
    %c1_i32 = arith.constant 1 : i32
    %19 = arith.muli %arg0, %c1_i32 : i32
    %20 = arith.addi %19, %arg2 : i32
    %c1024_i32 = arith.constant 1024 : i32
    %21 = arith.muli %20, %c1024_i32 : i32
    %22 = tpu.iota {dimensions = array<i32: 1>} : vector<1x1024xi32>
    %23 = vector.broadcast %21 : i32 to vector<1x1024xi32>
    %24 = arith.addi %22, %23 : vector<1x1024xi32>
    %25 = arith.sitofp %24 : vector<1x1024xi32> to vector<1x1024xf32>
    %cst = arith.constant 3.200000e+01 : f32
    %26 = vector.broadcast %cst : f32 to vector<1x1024xf32>
    %27 = arith.divf %25, %26 : vector<1x1024xf32>
    %28 = math.floor %27 : vector<1x1024xf32>
    %cst_24 = arith.constant 3.200000e+01 : f32
    %29 = vector.broadcast %cst_24 : f32 to vector<1x1024xf32>
    %30 = arith.mulf %28, %29 : vector<1x1024xf32>
    %31 = arith.subf %25, %30 : vector<1x1024xf32>
    %cst_25 = arith.constant 7.812500e-03 : f32
    %32 = vector.broadcast %cst_25 : f32 to vector<1x1024xf32>
    %33 = arith.mulf %31, %32 : vector<1x1024xf32>
    %cst_26 = arith.constant 7.812500e-03 : f32
    %34 = vector.broadcast %cst_26 : f32 to vector<1x1024xf32>
    %35 = arith.mulf %28, %34 : vector<1x1024xf32>
    %36 = tpu.concatenate %4, %33, %35 in 0 : vector<4x1024xf32>, vector<1x1024xf32>, vector<1x1024xf32> -> vector<6x1024xf32>
    %cst_27 = arith.constant dense<0.000000e+00> : vector<32x1024xf32>
    %37 = tpu.matmul %8, %36, %cst_27 {dimension_numbers = #tpu.dot_dimension_numbers<[1], [0], [0], [1], [0, 0, 1, 1], [], []>} : vector<32x6xf32>, vector<6x1024xf32>, vector<32x1024xf32> -> vector<32x1024xf32>
    %38 = vector.broadcast %10 : vector<32x1xf32> to vector<32x1024xf32>
    %39 = arith.addf %37, %38 : vector<32x1024xf32>
    %cst_28 = arith.constant 0.000000e+00 : f32
    %40 = vector.broadcast %cst_28 : f32 to vector<32x1024xf32>
    %41 = arith.maximumf %39, %40 : vector<32x1024xf32>
    %cst_29 = arith.constant dense<0.000000e+00> : vector<32x1024xf32>
    %42 = tpu.matmul %12, %41, %cst_29 {dimension_numbers = #tpu.dot_dimension_numbers<[1], [0], [0], [1], [0, 0, 1, 1], [], []>} : vector<32x32xf32>, vector<32x1024xf32>, vector<32x1024xf32> -> vector<32x1024xf32>
    %43 = vector.broadcast %14 : vector<32x1xf32> to vector<32x1024xf32>
    %44 = arith.addf %42, %43 : vector<32x1024xf32>
    %cst_30 = arith.constant 0.000000e+00 : f32
    %45 = vector.broadcast %cst_30 : f32 to vector<32x1024xf32>
    %46 = arith.maximumf %44, %45 : vector<32x1024xf32>
    %cst_31 = arith.constant dense<0.000000e+00> : vector<8x1024xf32>
    %47 = tpu.matmul %16, %46, %cst_31 {dimension_numbers = #tpu.dot_dimension_numbers<[1], [0], [0], [1], [0, 0, 1, 1], [], []>} : vector<8x32xf32>, vector<32x1024xf32>, vector<8x1024xf32> -> vector<8x1024xf32>
    %48 = vector.broadcast %18 : vector<8x1xf32> to vector<8x1024xf32>
    %49 = arith.addf %47, %48 : vector<8x1024xf32>
    %50 = arith.negf %49 : vector<8x1024xf32>
    %51 = math.exp %50 : vector<8x1024xf32>
    %cst_32 = arith.constant 1.000000e+00 : f32
    %52 = vector.broadcast %cst_32 : f32 to vector<8x1024xf32>
    %53 = arith.addf %52, %51 : vector<8x1024xf32>
    %54 = arith.divf %52, %53 : vector<8x1024xf32>
    %c0_33 = arith.constant 0 : index
    %c0_34 = arith.constant 0 : index
    %55 = vector.load %arg15[%c0_33, %c0_34] : memref<8x1xf32, #tpu.memory_space<vmem>>, vector<8x1xf32>
    %56 = arith.mulf %54, %6 : vector<8x1024xf32>
    %cst_35 = arith.constant dense<0.000000e+00> : vector<8xf32>
    %57 = vector.multi_reduction <add>, %56, %cst_35 [1] : vector<8x1024xf32> to vector<8xf32>
    %58 = vector.shape_cast %57 : vector<8xf32> to vector<8x1xf32>
    %59 = arith.addf %55, %58 : vector<8x1xf32>
    %c0_36 = arith.constant 0 : index
    %c0_37 = arith.constant 0 : index
    %60 = vector.load %arg15[%c0_36, %c0_37] : memref<8x1xf32, #tpu.memory_space<vmem>>, vector<8x1xf32>
    tpu.vector_store %arg15[%c0_36, %c0_37], %59 {strides = array<i32>} : memref<8x1xf32, #tpu.memory_space<vmem>>, vector<8x1xf32>,
    %c0_38 = arith.constant 0 : index
    %c0_39 = arith.constant 0 : index
    %61 = vector.load %arg16[%c0_38, %c0_39] : memref<8x1xf32, #tpu.memory_space<vmem>>, vector<8x1xf32>
    %62 = arith.mulf %54, %54 : vector<8x1024xf32>
    %cst_40 = arith.constant dense<0.000000e+00> : vector<8xf32>
    %63 = vector.multi_reduction <add>, %62, %cst_40 [1] : vector<8x1024xf32> to vector<8xf32>
    %64 = vector.shape_cast %63 : vector<8xf32> to vector<8x1xf32>
    %65 = arith.addf %61, %64 : vector<8x1xf32>
    %c0_41 = arith.constant 0 : index
    %c0_42 = arith.constant 0 : index
    %66 = vector.load %arg16[%c0_41, %c0_42] : memref<8x1xf32, #tpu.memory_space<vmem>>, vector<8x1xf32>
    tpu.vector_store %arg16[%c0_41, %c0_42], %65 {strides = array<i32>} : memref<8x1xf32, #tpu.memory_space<vmem>>, vector<8x1xf32>,
    %c0_43 = arith.constant 0 : index
    %c0_44 = arith.constant 0 : index
    %67 = vector.load %arg17[%c0_43, %c0_44] : memref<8x1xf32, #tpu.memory_space<vmem>>, vector<8x1xf32>
    %68 = arith.mulf %6, %6 : vector<8x1024xf32>
    %cst_45 = arith.constant dense<0.000000e+00> : vector<8xf32>
    %69 = vector.multi_reduction <add>, %68, %cst_45 [1] : vector<8x1024xf32> to vector<8xf32>
    %70 = vector.shape_cast %69 : vector<8xf32> to vector<8x1xf32>
    %71 = arith.addf %67, %70 : vector<8x1xf32>
    %c0_46 = arith.constant 0 : index
    %c0_47 = arith.constant 0 : index
    %72 = vector.load %arg17[%c0_46, %c0_47] : memref<8x1xf32, #tpu.memory_space<vmem>>, vector<8x1xf32>
    tpu.vector_store %arg17[%c0_46, %c0_47], %71 {strides = array<i32>} : memref<8x1xf32, #tpu.memory_space<vmem>>, vector<8x1xf32>,
    %c0_i32_48 = arith.constant 0 : i32
    %73 = arith.cmpi eq, %arg2, %c0_i32_48 : i32
    %74 = arith.extui %73 : i1 to i32
    %c0_i32_49 = arith.constant 0 : i32
    %75 = arith.cmpi ne, %74, %c0_i32_49 : i32
    scf.if %75 {
      %c0_50 = arith.constant 0 : index
      %c0_51 = arith.constant 0 : index
      %c0_52 = arith.constant 0 : index
      %76 = vector.load %arg5[%c0_50, %c0_51, %c0_52] : memref<1x8x1xf32, #tpu.memory_space<vmem>>, vector<1x8x1xf32>
      %77 = vector.shape_cast %76 : vector<1x8x1xf32> to vector<8x1xf32>
      %c0_53 = arith.constant 0 : index
      %c0_54 = arith.constant 0 : index
      %78 = vector.load %arg15[%c0_53, %c0_54] : memref<8x1xf32, #tpu.memory_space<vmem>>, vector<8x1xf32>
      %79 = arith.mulf %78, %77 : vector<8x1xf32>
      %80 = vector.shape_cast %79 : vector<8x1xf32> to vector<1x8x1xf32>
      %cst_55 = arith.constant dense<0.000000e+00> : vector<1xf32>
      %81 = vector.multi_reduction <add>, %80, %cst_55 [1, 2] : vector<1x8x1xf32> to vector<1xf32>
      %82 = vector.shape_cast %81 : vector<1xf32> to vector<1x1x1xf32>
      %83 = vector.extract %82[0, 0, 0] : f32 from vector<1x1x1xf32>
      %84 = vector.broadcast %83 : f32 to vector<1x1x1x1xf32>
      %c0_56 = arith.constant 0 : index
      %c0_57 = arith.constant 0 : index
      %c0_58 = arith.constant 0 : index
      %c0_59 = arith.constant 0 : index
      %85 = vector.load %arg12[%c0_56, %c0_57, %c0_58, %c0_59] : memref<1x1x1x1xf32, #tpu.memory_space<vmem>>, vector<1x1x1x1xf32>
      tpu.vector_store %arg12[%c0_56, %c0_57, %c0_58, %c0_59], %84 {strides = array<i32>} : memref<1x1x1x1xf32, #tpu.memory_space<vmem>>, vector<1x1x1x1xf32>,
      %c0_60 = arith.constant 0 : index
      %c0_61 = arith.constant 0 : index
      %86 = vector.load %arg16[%c0_60, %c0_61] : memref<8x1xf32, #tpu.memory_space<vmem>>, vector<8x1xf32>
      %87 = arith.mulf %86, %77 : vector<8x1xf32>
      %88 = vector.shape_cast %87 : vector<8x1xf32> to vector<1x8x1xf32>
      %cst_62 = arith.constant dense<0.000000e+00> : vector<1xf32>
      %89 = vector.multi_reduction <add>, %88, %cst_62 [1, 2] : vector<1x8x1xf32> to vector<1xf32>
      %90 = vector.shape_cast %89 : vector<1xf32> to vector<1x1x1xf32>
      %91 = vector.extract %90[0, 0, 0] : f32 from vector<1x1x1xf32>
      %92 = vector.broadcast %91 : f32 to vector<1x1x1x1xf32>
      %c0_63 = arith.constant 0 : index
      %c0_64 = arith.constant 0 : index
      %c0_65 = arith.constant 0 : index
      %c0_66 = arith.constant 0 : index
      %93 = vector.load %arg13[%c0_63, %c0_64, %c0_65, %c0_66] : memref<1x1x1x1xf32, #tpu.memory_space<vmem>>, vector<1x1x1x1xf32>
      tpu.vector_store %arg13[%c0_63, %c0_64, %c0_65, %c0_66], %92 {strides = array<i32>} : memref<1x1x1x1xf32, #tpu.memory_space<vmem>>, vector<1x1x1x1xf32>,
      %c0_67 = arith.constant 0 : index
      %c0_68 = arith.constant 0 : index
      %94 = vector.load %arg17[%c0_67, %c0_68] : memref<8x1xf32, #tpu.memory_space<vmem>>, vector<8x1xf32>
      %95 = arith.mulf %94, %77 : vector<8x1xf32>
      %96 = vector.shape_cast %95 : vector<8x1xf32> to vector<1x8x1xf32>
      %cst_69 = arith.constant dense<0.000000e+00> : vector<1xf32>
      %97 = vector.multi_reduction <add>, %96, %cst_69 [1, 2] : vector<1x8x1xf32> to vector<1xf32>
      %98 = vector.shape_cast %97 : vector<1xf32> to vector<1x1x1xf32>
      %99 = vector.extract %98[0, 0, 0] : f32 from vector<1x1x1xf32>
      %100 = vector.broadcast %99 : f32 to vector<1x1x1x1xf32>
      %c0_70 = arith.constant 0 : index
      %c0_71 = arith.constant 0 : index
      %c0_72 = arith.constant 0 : index
      %c0_73 = arith.constant 0 : index
      %101 = vector.load %arg14[%c0_70, %c0_71, %c0_72, %c0_73] : memref<1x1x1x1xf32, #tpu.memory_space<vmem>>, vector<1x1x1x1xf32>
      tpu.vector_store %arg14[%c0_70, %c0_71, %c0_72, %c0_73], %100 {strides = array<i32>} : memref<1x1x1x1xf32, #tpu.memory_space<vmem>>, vector<1x1x1x1xf32>,
    } else {
    }
    return
  }
  func.func @transform_0(%arg0: i32, %arg1: i32, %arg2: i32) -> (i32, i32, i32) {
    %c1_i32 = arith.constant 1 : i32
    %0 = arith.muli %arg0, %c1_i32 : i32
    %1 = arith.addi %0, %arg2 : i32
    %c0_i32 = arith.constant 0 : i32
    %c0_i32_0 = arith.constant 0 : i32
    return %arg1, %c0_i32, %1 : i32, i32, i32
  }
  func.func @transform_1(%arg0: i32, %arg1: i32, %arg2: i32) -> (i32, i32, i32) {
    %c1_i32 = arith.constant 1 : i32
    %0 = arith.muli %arg0, %c1_i32 : i32
    %1 = arith.addi %0, %arg2 : i32
    %c0_i32 = arith.constant 0 : i32
    %c0_i32_0 = arith.constant 0 : i32
    return %arg1, %c0_i32, %1 : i32, i32, i32
  }
  func.func @transform_2(%arg0: i32, %arg1: i32, %arg2: i32) -> (i32, i32, i32) {
    %c0_i32 = arith.constant 0 : i32
    %c0_i32_0 = arith.constant 0 : i32
    %c0_i32_1 = arith.constant 0 : i32
    return %arg1, %c0_i32, %c0_i32_0 : i32, i32, i32
  }
  func.func @transform_3(%arg0: i32, %arg1: i32, %arg2: i32) -> (i32, i32, i32) {
    %c0_i32 = arith.constant 0 : i32
    %c0_i32_0 = arith.constant 0 : i32
    %c0_i32_1 = arith.constant 0 : i32
    return %arg1, %c0_i32, %c0_i32_0 : i32, i32, i32
  }
  func.func @transform_4(%arg0: i32, %arg1: i32, %arg2: i32) -> (i32, i32, i32) {
    %c0_i32 = arith.constant 0 : i32
    %c0_i32_0 = arith.constant 0 : i32
    %c0_i32_1 = arith.constant 0 : i32
    return %arg1, %c0_i32, %c0_i32_0 : i32, i32, i32
  }
  func.func @transform_5(%arg0: i32, %arg1: i32, %arg2: i32) -> (i32, i32, i32) {
    %c0_i32 = arith.constant 0 : i32
    %c0_i32_0 = arith.constant 0 : i32
    %c0_i32_1 = arith.constant 0 : i32
    return %arg1, %c0_i32, %c0_i32_0 : i32, i32, i32
  }
  func.func @transform_6(%arg0: i32, %arg1: i32, %arg2: i32) -> (i32, i32, i32) {
    %c0_i32 = arith.constant 0 : i32
    %c0_i32_0 = arith.constant 0 : i32
    %c0_i32_1 = arith.constant 0 : i32
    return %arg1, %c0_i32, %c0_i32_0 : i32, i32, i32
  }
  func.func @transform_7(%arg0: i32, %arg1: i32, %arg2: i32) -> (i32, i32, i32) {
    %c0_i32 = arith.constant 0 : i32
    %c0_i32_0 = arith.constant 0 : i32
    %c0_i32_1 = arith.constant 0 : i32
    return %arg1, %c0_i32, %c0_i32_0 : i32, i32, i32
  }
  func.func @transform_8(%arg0: i32, %arg1: i32, %arg2: i32) -> (i32, i32, i32) {
    %c0_i32 = arith.constant 0 : i32
    %c0_i32_0 = arith.constant 0 : i32
    %c0_i32_1 = arith.constant 0 : i32
    return %arg1, %c0_i32, %c0_i32_0 : i32, i32, i32
  }
  func.func @transform_9(%arg0: i32, %arg1: i32, %arg2: i32) -> (i32, i32, i32, i32) {
    %c0_i32 = arith.constant 0 : i32
    %c0_i32_0 = arith.constant 0 : i32
    %c0_i32_1 = arith.constant 0 : i32
    return %arg0, %arg1, %c0_i32, %c0_i32_0 : i32, i32, i32, i32
  }
  func.func @transform_10(%arg0: i32, %arg1: i32, %arg2: i32) -> (i32, i32, i32, i32) {
    %c0_i32 = arith.constant 0 : i32
    %c0_i32_0 = arith.constant 0 : i32
    %c0_i32_1 = arith.constant 0 : i32
    return %arg0, %arg1, %c0_i32, %c0_i32_0 : i32, i32, i32, i32
  }
  func.func @transform_11(%arg0: i32, %arg1: i32, %arg2: i32) -> (i32, i32, i32, i32) {
    %c0_i32 = arith.constant 0 : i32
    %c0_i32_0 = arith.constant 0 : i32
    %c0_i32_1 = arith.constant 0 : i32
    return %arg0, %arg1, %c0_i32, %c0_i32_0 : i32, i32, i32, i32
  }
}

</mosaic_0001>

<llo_original>
// kernel: tpu_custom_call.1
$region0: #{tpu_custom_call.1}
  #allocation0 [shape = 'u32[]', space=smem, size = 0x4, offset = 0x4, fixed_abs, tag = 'smem constant byte address 0x4 - core index']
  #allocation1 [shape = 'u32[144,128]{1,0:T(1,128)}', space=vmem, size = 0x12000, scoped, tag = 'internal scratch']
  #allocation2 [shape = 'f32[8,1]{1,0:T(8,128)}', space=vmem, size = 0x1000, scoped, tag = 'scratch operand']
  #allocation3 [shape = 'f32[8,1]{1,0:T(8,128)}', space=vmem, size = 0x1000, scoped, tag = 'scratch operand']
  #allocation4 [shape = 'f32[8,1]{1,0:T(8,128)}', space=vmem, size = 0x1000, scoped, tag = 'scratch operand']
  %s0 = inlined_call_operand.vmem [shape: f32[3,4,1024], index: 0, kind: input, shape index: {}]
  %s1 = inlined_call_operand.vmem [shape: f32[3,8,1024], index: 1, kind: input, shape index: {}]
  %s2 = inlined_call_operand.vmem [shape: f32[3,8,1], index: 2, kind: input, shape index: {}]
  %s3 = inlined_call_operand.vmem [shape: f32[3,32,6], index: 3, kind: input, shape index: {}]
  %s4 = inlined_call_operand.vmem [shape: f32[3,32,1], index: 4, kind: input, shape index: {}]
  %s5 = inlined_call_operand.hbm [shape: f32[3,32,32], index: 5, kind: input, shape index: {}]
  %s6 = inlined_call_operand.vmem [shape: f32[3,32,1], index: 6, kind: input, shape index: {}]
  %s7 = inlined_call_operand.vmem [shape: f32[3,8,32], index: 7, kind: input, shape index: {}]
  %s8 = inlined_call_operand.vmem [shape: f32[3,8,1], index: 8, kind: input, shape index: {}]
  %s9 = inlined_call_operand.vmem [shape: f32[1,3,1,1], index: 9, kind: output, shape index: {0}]
  %s10 = inlined_call_operand.vmem [shape: f32[1,3,1,1], index: 10, kind: output, shape index: {1}]
  %s11 = inlined_call_operand.vmem [shape: f32[1,3,1,1], index: 11, kind: output, shape index: {2}]
  %12 = xla_tuple %s9, %s10, %s11
  %s13 = sld [smem:[#allocation0]]
  $region97: #{tpu_custom_call.1} parent=0
    _
  %s15 = ssub.s32 1, %s13
  %s16 = scalar_select 0, %s15, %s13
  $region1: #{tpu_custom_call.1} parent=0
    #allocation5 [shape = 'u8[32768]{0}', space=vmem, size = 0x8000, scoped, tag = 'input window, operand 5']
    #allocation6 [shape = 's32[2]{0}', space=sflag, size = 0x8, scoped, tag = 'scoped memory for tpu_custom_call.1']
    %17 = vsyncpa [#allocation6], 0
    %s18 = scalar_lea.sflag [#allocation6], 1
    %19 = vsyncpa %s18, 0
    loop: start=0, step=1, limit=5
    $region2: #{tpu_custom_call.1} parent=1 // loop_pre_header
      _
    $region3: #{tpu_custom_call.1} parent=1 // loop_header
      %s21 = sphi 0, %s25
      %p22 = scmp.ge.s32.totalorder %s21, 5
      %s28 = sphi 0, %s47
      %s29 = sphi 0, %s43
      %s30 = sphi 0, %s39
      %s31 = sphi 0, %s28
      %s32 = sphi 0, %s29
      %s33 = sphi 0, %s30
      %s34 = sphi 0, %s31
      %s35 = sphi 0, %s32
      %s36 = sphi 0, %s33
      %s54 = sphi 0, %s56
      %s57 = sphi 0, %s54
      %s58 = sphi 0, %s57
      %s74 = sphi 0, %s58
      %s84 = sphi 0, %s86
      %s87 = sphi 0, %s84
      %s88 = sphi 0, %s87
      %s104 = sphi 0, %s88
      %s110 = sphi 0, %s112
      %s113 = sphi 0, %s110
      %s114 = sphi 0, %s113
      %s130 = sphi 0, %s114
      %s136 = sphi 0, %s138
      %s139 = sphi 0, %s136
      %s140 = sphi 0, %s139
      %s156 = sphi 0, %s140
      %s162 = sphi 0, %s164
      %s165 = sphi 0, %s162
      %s166 = sphi 0, %s165
      %s182 = sphi 0, %s166
      %s188 = sphi 0, %s190
      %s191 = sphi 0, %s188
      %s192 = sphi 0, %s191
      %s208 = sphi 0, %s192
      %s214 = sphi 0, %s216
      %s217 = sphi 0, %s214
      %s218 = sphi 0, %s217
      %s234 = sphi 0, %s218
      %s240 = sphi 0, %s242
      %s243 = sphi 0, %s240
      %s244 = sphi 0, %s243
      %s260 = sphi 0, %s244
      %s266 = sphi 0, %s268
      %s269 = sphi 0, %s266
      %s270 = sphi 0, %s269
      %s286 = sphi 0, %s270
      %s294 = sphi 0, %s296
      %s297 = sphi 0, %s294
      %s298 = sphi 0, %s297
      %s314 = sphi 0, %s298
      %s322 = sphi 0, %s324
      %s325 = sphi 0, %s322
      %s326 = sphi 0, %s325
      %s342 = sphi 0, %s326
      %s350 = sphi 0, %s352
      %s353 = sphi 0, %s350
      %s354 = sphi 0, %s353
      %s370 = sphi 0, %s354
    $region4: #{tpu_custom_call.1} parent=1 // loop_header_branch
      %24 = sbr.rel (%p22) target = $region8
    $region5: #{tpu_custom_call.1} parent=1 // loop_body
      %s26 = ssub.s32 %s21, 1
      %s27 = ssub.s32 %s21, 2
      %s37 = sadd.s32 1, %s30
      %p38 = scmp.ge.s32.totalorder %s37, 1
      %s39 = scalar_select %p38, 0, %s37
      %s40 = sadd.s32 1, %s29
      %s41 = scalar_select %p38, %s40, %s29
      %p42 = scmp.ge.s32.totalorder %s41, 3
      %s43 = scalar_select %p42, 0, %s41
      %s44 = sadd.s32 1, %s28
      %s45 = scalar_select %p42, %s44, %s28
      %p46 = scmp.ge.s32.totalorder %s45, 1
      %s47 = scalar_select %p46, 0, %s45
      %s48 = sadd.s32 %s28, %s30
      %s49 = sadd.s32 %s47, %s39
      %s50 = ssub.s32 %s29, %s43
      %s51 = ssub.s32 %s48, %s49
      %s52 = sor.u32 %s50, %s51
      %p53 = scmp.eq.s32.totalorder %s52, 0
      %s55 = sadd.s32 %s54, 1
      %s56 = scalar_select %p53, %s54, %s55
      %p59 = pneg %p53
      %p60 = scmp.eq.s32.totalorder %s21, 2
      %p61 = por %p59, %p60
      %p62 = scmp.ne.s32.totalorder %s54, %s57
      %p63 = scmp.eq.s32.totalorder %s21, 0
      %p64 = por %p62, %p63
      %p65 = scmp.ne.s32.totalorder %s54, %s57
      %p66 = scmp.eq.s32.totalorder %s26, 2
      %p67 = por %p65, %p66
      %p68 = scmp.ne.s32.totalorder %s57, %s58
      %p69 = scmp.eq.s32.totalorder %s26, 0
      %p70 = por %p68, %p69
      %p71 = scmp.ne.s32.totalorder %s57, %s58
      %p72 = scmp.eq.s32.totalorder %s27, 2
      %p73 = por %p71, %p72
      %p75 = scmp.ne.s32.totalorder %s58, %s74
      %p76 = scmp.eq.s32.totalorder %s27, 0
      %p77 = por %p75, %p76
      %s78 = sadd.s32 %s28, %s30
      %s79 = sadd.s32 %s47, %s39
      %s80 = ssub.s32 %s29, %s43
      %s81 = ssub.s32 %s78, %s79
      %s82 = sor.u32 %s80, %s81
      %p83 = scmp.eq.s32.totalorder %s82, 0
      %s85 = sadd.s32 %s84, 1
      %s86 = scalar_select %p83, %s84, %s85
      %p89 = pneg %p83
      %p90 = scmp.eq.s32.totalorder %s21, 2
      %p91 = por %p89, %p90
      %p92 = scmp.ne.s32.totalorder %s84, %s87
      %p93 = scmp.eq.s32.totalorder %s21, 0
      %p94 = por %p92, %p93
      %p95 = scmp.ne.s32.totalorder %s84, %s87
      %p96 = scmp.eq.s32.totalorder %s26, 2
      %p97 = por %p95, %p96
      %p98 = scmp.ne.s32.totalorder %s87, %s88
      %p99 = scmp.eq.s32.totalorder %s26, 0
      %p100 = por %p98, %p99
      %p101 = scmp.ne.s32.totalorder %s87, %s88
      %p102 = scmp.eq.s32.totalorder %s27, 2
      %p103 = por %p101, %p102
      %p105 = scmp.ne.s32.totalorder %s88, %s104
      %p106 = scmp.eq.s32.totalorder %s27, 0
      %p107 = por %p105, %p106
      %s108 = ssub.s32 %s29, %s43
      %p109 = scmp.eq.s32.totalorder %s108, 0
      %s111 = sadd.s32 %s110, 1
      %s112 = scalar_select %p109, %s110, %s111
      %p115 = pneg %p109
      %p116 = scmp.eq.s32.totalorder %s21, 2
      %p117 = por %p115, %p116
      %p118 = scmp.ne.s32.totalorder %s110, %s113
      %p119 = scmp.eq.s32.totalorder %s21, 0
      %p120 = por %p118, %p119
      %p121 = scmp.ne.s32.totalorder %s110, %s113
      %p122 = scmp.eq.s32.totalorder %s26, 2
      %p123 = por %p121, %p122
      %p124 = scmp.ne.s32.totalorder %s113, %s114
      %p125 = scmp.eq.s32.totalorder %s26, 0
      %p126 = por %p124, %p125
      %p127 = scmp.ne.s32.totalorder %s113, %s114
      %p128 = scmp.eq.s32.totalorder %s27, 2
      %p129 = por %p127, %p128
      %p131 = scmp.ne.s32.totalorder %s114, %s130
      %p132 = scmp.eq.s32.totalorder %s27, 0
      %p133 = por %p131, %p132
      %s134 = ssub.s32 %s29, %s43
      %p135 = scmp.eq.s32.totalorder %s134, 0
      %s137 = sadd.s32 %s136, 1
      %s138 = scalar_select %p135, %s136, %s137
      %p141 = pneg %p135
      %p142 = scmp.eq.s32.totalorder %s21, 2
      %p143 = por %p141, %p142
      %p144 = scmp.ne.s32.totalorder %s136, %s139
      %p145 = scmp.eq.s32.totalorder %s21, 0
      %p146 = por %p144, %p145
      %p147 = scmp.ne.s32.totalorder %s136, %s139
      %p148 = scmp.eq.s32.totalorder %s26, 2
      %p149 = por %p147, %p148
      %p150 = scmp.ne.s32.totalorder %s139, %s140
      %p151 = scmp.eq.s32.totalorder %s26, 0
      %p152 = por %p150, %p151
      %p153 = scmp.ne.s32.totalorder %s139, %s140
      %p154 = scmp.eq.s32.totalorder %s27, 2
      %p155 = por %p153, %p154
      %p157 = scmp.ne.s32.totalorder %s140, %s156
      %p158 = scmp.eq.s32.totalorder %s27, 0
      %p159 = por %p157, %p158
      %s160 = ssub.s32 %s29, %s43
      %p161 = scmp.eq.s32.totalorder %s160, 0
      %s163 = sadd.s32 %s162, 1
      %s164 = scalar_select %p161, %s162, %s163
      %p167 = pneg %p161
      %p168 = scmp.eq.s32.totalorder %s21, 2
      %p169 = por %p167, %p168
      %p170 = scmp.ne.s32.totalorder %s162, %s165
      %p171 = scmp.eq.s32.totalorder %s21, 0
      %p172 = por %p170, %p171
      %p173 = scmp.ne.s32.totalorder %s162, %s165
      %p174 = scmp.eq.s32.totalorder %s26, 2
      %p175 = por %p173, %p174
      %p176 = scmp.ne.s32.totalorder %s165, %s166
      %p177 = scmp.eq.s32.totalorder %s26, 0
      %p178 = por %p176, %p177
      %p179 = scmp.ne.s32.totalorder %s165, %s166
      %p180 = scmp.eq.s32.totalorder %s27, 2
      %p181 = por %p179, %p180
      %p183 = scmp.ne.s32.totalorder %s166, %s182
      %p184 = scmp.eq.s32.totalorder %s27, 0
      %p185 = por %p183, %p184
      %s186 = ssub.s32 %s29, %s43
      %p187 = scmp.eq.s32.totalorder %s186, 0
      %s189 = sadd.s32 %s188, 1
      %s190 = scalar_select %p187, %s188, %s189
      %p193 = pneg %p187
      %p194 = scmp.eq.s32.totalorder %s21, 2
      %p195 = por %p193, %p194
      %p196 = scmp.ne.s32.totalorder %s188, %s191
      %p197 = scmp.eq.s32.totalorder %s21, 0
      %p198 = por %p196, %p197
      %p199 = scmp.ne.s32.totalorder %s188, %s191
      %p200 = scmp.eq.s32.totalorder %s26, 2
      %p201 = por %p199, %p200
      %p202 = scmp.ne.s32.totalorder %s191, %s192
      %p203 = scmp.eq.s32.totalorder %s26, 0
      %p204 = por %p202, %p203
      %p205 = scmp.ne.s32.totalorder %s191, %s192
      %p206 = scmp.eq.s32.totalorder %s27, 2
      %p207 = por %p205, %p206
      %p209 = scmp.ne.s32.totalorder %s192, %s208
      %p210 = scmp.eq.s32.totalorder %s27, 0
      %p211 = por %p209, %p210
      %s212 = ssub.s32 %s29, %s43
      %p213 = scmp.eq.s32.totalorder %s212, 0
      %s215 = sadd.s32 %s214, 1
      %s216 = scalar_select %p213, %s214, %s215
      %p219 = pneg %p213
      %p220 = scmp.eq.s32.totalorder %s21, 2
      %p221 = por %p219, %p220
      %p222 = scmp.ne.s32.totalorder %s214, %s217
      %p223 = scmp.eq.s32.totalorder %s21, 0
      %p224 = por %p222, %p223
      %p225 = scmp.ne.s32.totalorder %s214, %s217
      %p226 = scmp.eq.s32.totalorder %s26, 2
      %p227 = por %p225, %p226
      %p228 = scmp.ne.s32.totalorder %s217, %s218
      %p229 = scmp.eq.s32.totalorder %s26, 0
      %p230 = por %p228, %p229
      %p231 = scmp.ne.s32.totalorder %s217, %s218
      %p232 = scmp.eq.s32.totalorder %s27, 2
      %p233 = por %p231, %p232
      %p235 = scmp.ne.s32.totalorder %s218, %s234
      %p236 = scmp.eq.s32.totalorder %s27, 0
      %p237 = por %p235, %p236
      %s238 = ssub.s32 %s29, %s43
      %p239 = scmp.eq.s32.totalorder %s238, 0
      %s241 = sadd.s32 %s240, 1
      %s242 = scalar_select %p239, %s240, %s241
      %p245 = pneg %p239
      %p246 = scmp.eq.s32.totalorder %s21, 2
      %p247 = por %p245, %p246
      %p248 = scmp.ne.s32.totalorder %s240, %s243
      %p249 = scmp.eq.s32.totalorder %s21, 0
      %p250 = por %p248, %p249
      %p251 = scmp.ne.s32.totalorder %s240, %s243
      %p252 = scmp.eq.s32.totalorder %s26, 2
      %p253 = por %p251, %p252
      %p254 = scmp.ne.s32.totalorder %s243, %s244
      %p255 = scmp.eq.s32.totalorder %s26, 0
      %p256 = por %p254, %p255
      %p257 = scmp.ne.s32.totalorder %s243, %s244
      %p258 = scmp.eq.s32.totalorder %s27, 2
      %p259 = por %p257, %p258
      %p261 = scmp.ne.s32.totalorder %s244, %s260
      %p262 = scmp.eq.s32.totalorder %s27, 0
      %p263 = por %p261, %p262
      %s264 = ssub.s32 %s29, %s43
      %p265 = scmp.eq.s32.totalorder %s264, 0
      %s267 = sadd.s32 %s266, 1
      %s268 = scalar_select %p265, %s266, %s267
      %p271 = pneg %p265
      %p272 = scmp.eq.s32.totalorder %s21, 2
      %p273 = por %p271, %p272
      %p274 = scmp.ne.s32.totalorder %s266, %s269
      %p275 = scmp.eq.s32.totalorder %s21, 0
      %p276 = por %p274, %p275
      %p277 = scmp.ne.s32.totalorder %s266, %s269
      %p278 = scmp.eq.s32.totalorder %s26, 2
      %p279 = por %p277, %p278
      %p280 = scmp.ne.s32.totalorder %s269, %s270
      %p281 = scmp.eq.s32.totalorder %s26, 0
      %p282 = por %p280, %p281
      %p283 = scmp.ne.s32.totalorder %s269, %s270
      %p284 = scmp.eq.s32.totalorder %s27, 2
      %p285 = por %p283, %p284
      %p287 = scmp.ne.s32.totalorder %s270, %s286
      %p288 = scmp.eq.s32.totalorder %s27, 0
      %p289 = por %p287, %p288
      %s290 = ssub.s32 %s28, %s47
      %s291 = ssub.s32 %s29, %s43
      %s292 = sor.u32 %s290, %s291
      %p293 = scmp.eq.s32.totalorder %s292, 0
      %s295 = sadd.s32 %s294, 1
      %s296 = scalar_select %p293, %s294, %s295
      %p299 = pneg %p293
      %p300 = scmp.eq.s32.totalorder %s21, 2
      %p301 = por %p299, %p300
      %p302 = scmp.ne.s32.totalorder %s294, %s297
      %p303 = scmp.eq.s32.totalorder %s21, 0
      %p304 = por %p302, %p303
      %p305 = scmp.ne.s32.totalorder %s294, %s297
      %p306 = scmp.eq.s32.totalorder %s26, 2
      %p307 = por %p305, %p306
      %p308 = scmp.ne.s32.totalorder %s297, %s298
      %p309 = scmp.eq.s32.totalorder %s26, 0
      %p310 = por %p308, %p309
      %p311 = scmp.ne.s32.totalorder %s297, %s298
      %p312 = scmp.eq.s32.totalorder %s27, 2
      %p313 = por %p311, %p312
      %p315 = scmp.ne.s32.totalorder %s298, %s314
      %p316 = scmp.eq.s32.totalorder %s27, 0
      %p317 = por %p315, %p316
      %s318 = ssub.s32 %s28, %s47
      %s319 = ssub.s32 %s29, %s43
      %s320 = sor.u32 %s318, %s319
      %p321 = scmp.eq.s32.totalorder %s320, 0
      %s323 = sadd.s32 %s322, 1
      %s324 = scalar_select %p321, %s322, %s323
      %p327 = pneg %p321
      %p328 = scmp.eq.s32.totalorder %s21, 2
      %p329 = por %p327, %p328
      %p330 = scmp.ne.s32.totalorder %s322, %s325
      %p331 = scmp.eq.s32.totalorder %s21, 0
      %p332 = por %p330, %p331
      %p333 = scmp.ne.s32.totalorder %s322, %s325
      %p334 = scmp.eq.s32.totalorder %s26, 2
      %p335 = por %p333, %p334
      %p336 = scmp.ne.s32.totalorder %s325, %s326
      %p337 = scmp.eq.s32.totalorder %s26, 0
      %p338 = por %p336, %p337
      %p339 = scmp.ne.s32.totalorder %s325, %s326
      %p340 = scmp.eq.s32.totalorder %s27, 2
      %p341 = por %p339, %p340
      %p343 = scmp.ne.s32.totalorder %s326, %s342
      %p344 = scmp.eq.s32.totalorder %s27, 0
      %p345 = por %p343, %p344
      %s346 = ssub.s32 %s28, %s47
      %s347 = ssub.s32 %s29, %s43
      %s348 = sor.u32 %s346, %s347
      %p349 = scmp.eq.s32.totalorder %s348, 0
      %s351 = sadd.s32 %s350, 1
      %s352 = scalar_select %p349, %s350, %s351
      %p355 = pneg %p349
      %p356 = scmp.eq.s32.totalorder %s21, 2
      %p357 = por %p355, %p356
      %p358 = scmp.ne.s32.totalorder %s350, %s353
      %p359 = scmp.eq.s32.totalorder %s21, 0
      %p360 = por %p358, %p359
      %p361 = scmp.ne.s32.totalorder %s350, %s353
      %p362 = scmp.eq.s32.totalorder %s26, 2
      %p363 = por %p361, %p362
      %p364 = scmp.ne.s32.totalorder %s353, %s354
      %p365 = scmp.eq.s32.totalorder %s26, 0
      %p366 = por %p364, %p365
      %p367 = scmp.ne.s32.totalorder %s353, %s354
      %p368 = scmp.eq.s32.totalorder %s27, 2
      %p369 = por %p367, %p368
      %p371 = scmp.ne.s32.totalorder %s354, %s370
      %p372 = scmp.eq.s32.totalorder %s27, 0
      %p373 = por %p371, %p372
      %p374 = scmp.le.s32.totalorder 1, %s21
      %p375 = scmp.lt.s32.totalorder %s21, 4
      %p376 = pnand %p374, %p375
      %p377 = pneg %p376
      // Predicated region
      $region9: #{tpu_custom_call.1} parent=5 // pred_check
        _
      $region10: #{tpu_custom_call.1} parent=5 // pred_check_branch
        %379 = sbr.rel (%p376) target = $region12
      $region11: #{tpu_custom_call.1} parent=5 // pred_region
        %s380 = ssub.s32 %s21, 1
      $region12: #{tpu_custom_call.1} parent=5 // pred_fallthru
        _
      %p381 = scmp.lt.s32.totalorder %s21, 3
      // Predicated region
      $region13: #{tpu_custom_call.1} parent=5 // pred_check
        %p382 = pneg %p381
      $region14: #{tpu_custom_call.1} parent=5 // pred_check_branch
        %384 = sbr.rel (%p382) target = $region16
      $region15: #{tpu_custom_call.1} parent=5 // pred_region
        // Predicated region
        $region17: #{tpu_custom_call.1} parent=15 // pred_check
          %p385 = pneg %p64
        $region18: #{tpu_custom_call.1} parent=15 // pred_check_branch
          %387 = sbr.rel (%p385) target = $region20
        $region19: #{tpu_custom_call.1} parent=15 // pred_region
          %s388 = sadd.s32 %s28, %s30
          %s389 = smul.u32 8, %s388
          %p390 = scmp.lt.s32.totalorder %s29, 2
          %s391 = scalar_select %p390, %s29, 2
          %p392 = scmp.lt.s32.totalorder %s389, 7
          %s393 = scalar_select %p392, %s389, 7
          %s394 = smul.addr %s391, 8
          %s395 = sadd.s32 %s393, %s394
          %s396 = smul.addr %s395, 4
          %s397 = scalar_lea.vmem %s0, %s396
          %s398 = sadd.s32 %s28, %s30
          %s399 = smul.u32 8, %s398
        $region20: #{tpu_custom_call.1} parent=15 // pred_fallthru
          _
        // Predicated region
        $region21: #{tpu_custom_call.1} parent=15 // pred_check
          %p400 = pneg %p94
        $region22: #{tpu_custom_call.1} parent=15 // pred_check_branch
          %402 = sbr.rel (%p400) target = $region24
        $region23: #{tpu_custom_call.1} parent=15 // pred_region
          %s403 = sadd.s32 %s28, %s30
          %s404 = smul.u32 8, %s403
          %p405 = scmp.lt.s32.totalorder %s29, 2
          %s406 = scalar_select %p405, %s29, 2
          %p407 = scmp.lt.s32.totalorder %s404, 7
          %s408 = scalar_select %p407, %s404, 7
          %s409 = smul.addr %s406, 8
          %s410 = sadd.s32 %s408, %s409
          %s411 = smul.addr %s410, 8
          %s412 = scalar_lea.vmem %s1, %s411
          %s413 = sadd.s32 %s28, %s30
          %s414 = smul.u32 8, %s413
        $region24: #{tpu_custom_call.1} parent=15 // pred_fallthru
          _
        // Predicated region
        $region25: #{tpu_custom_call.1} parent=15 // pred_check
          %p415 = pneg %p120
        $region26: #{tpu_custom_call.1} parent=15 // pred_check_branch
          %417 = sbr.rel (%p415) target = $region28
        $region27: #{tpu_custom_call.1} parent=15 // pred_region
          %p418 = scmp.lt.s32.totalorder %s29, 2
          %s419 = scalar_select %p418, %s29, 2
          %s420 = smul.addr %s419, 8
          %s421 = scalar_lea.vmem %s2, %s420
        $region28: #{tpu_custom_call.1} parent=15 // pred_fallthru
          _
        // Predicated region
        $region29: #{tpu_custom_call.1} parent=15 // pred_check
          %p422 = pneg %p146
        $region30: #{tpu_custom_call.1} parent=15 // pred_check_branch
          %424 = sbr.rel (%p422) target = $region32
        $region31: #{tpu_custom_call.1} parent=15 // pred_region
          %p425 = scmp.lt.s32.totalorder %s29, 2
          %s426 = scalar_select %p425, %s29, 2
          %s427 = smul.addr %s426, 4
          %s428 = smul.addr %s427, 8
          %s429 = scalar_lea.vmem %s3, %s428
        $region32: #{tpu_custom_call.1} parent=15 // pred_fallthru
          _
        // Predicated region
        $region33: #{tpu_custom_call.1} parent=15 // pred_check
          %p430 = pneg %p172
        $region34: #{tpu_custom_call.1} parent=15 // pred_check_branch
          %432 = sbr.rel (%p430) target = $region36
        $region35: #{tpu_custom_call.1} parent=15 // pred_region
          %p433 = scmp.lt.s32.totalorder %s29, 2
          %s434 = scalar_select %p433, %s29, 2
          %s435 = smul.addr %s434, 4
          %s436 = smul.addr %s435, 8
          %s437 = scalar_lea.vmem %s4, %s436
        $region36: #{tpu_custom_call.1} parent=15 // pred_fallthru
          _
        // Predicated region
        $region37: #{tpu_custom_call.1} parent=15 // pred_check
          %p438 = pneg %p198
        $region38: #{tpu_custom_call.1} parent=15 // pred_check_branch
          %440 = sbr.rel (%p438) target = $region40
        $region39: #{tpu_custom_call.1} parent=15 // pred_region
          %s441 = sand.u32 %s188, 1
          %s442 = scalar_lea.sflag [#allocation6], %s441
          %s443 = sand.u32 %s188, 1
          %s444 = smul.addr %s443, 32
          %s445 = scalar_lea.vmem [#allocation5], %s444
          %s447 = ssub.s32 512, 512
          %448 = vsyncadd %s442, %s447
          %s449 = smul.addr %s29, 4
          %s450 = smul.addr %s449, 128
          %s451 = scalar_lea.hbm %s5, %s450
          %s452 = sshll.u32 %s445, 4
          %s453 = int_to_ptr.vmem [resolvable:$true] %s452
          %458 = dma.hbm_to_vmem [thread:$0]  %s451, 512, %s453, %s442, 128, 128, 8
        $region40: #{tpu_custom_call.1} parent=15 // pred_fallthru
          _
        // Predicated region
        $region41: #{tpu_custom_call.1} parent=15 // pred_check
          %p459 = pneg %p224
        $region42: #{tpu_custom_call.1} parent=15 // pred_check_branch
          %461 = sbr.rel (%p459) target = $region44
        $region43: #{tpu_custom_call.1} parent=15 // pred_region
          %p462 = scmp.lt.s32.totalorder %s29, 2
          %s463 = scalar_select %p462, %s29, 2
          %s464 = smul.addr %s463, 4
          %s465 = smul.addr %s464, 8
          %s466 = scalar_lea.vmem %s6, %s465
        $region44: #{tpu_custom_call.1} parent=15 // pred_fallthru
          _
        // Predicated region
        $region45: #{tpu_custom_call.1} parent=15 // pred_check
          %p467 = pneg %p250
        $region46: #{tpu_custom_call.1} parent=15 // pred_check_branch
          %469 = sbr.rel (%p467) target = $region48
        $region47: #{tpu_custom_call.1} parent=15 // pred_region
          %p470 = scmp.lt.s32.totalorder %s29, 2
          %s471 = scalar_select %p470, %s29, 2
          %s472 = smul.addr %s471, 8
          %s473 = scalar_lea.vmem %s7, %s472
        $region48: #{tpu_custom_call.1} parent=15 // pred_fallthru
          _
        // Predicated region
        $region49: #{tpu_custom_call.1} parent=15 // pred_check
          %p474 = pneg %p276
        $region50: #{tpu_custom_call.1} parent=15 // pred_check_branch
          %476 = sbr.rel (%p474) target = $region52
        $region51: #{tpu_custom_call.1} parent=15 // pred_region
          %p477 = scmp.lt.s32.totalorder %s29, 2
          %s478 = scalar_select %p477, %s29, 2
          %s479 = smul.addr %s478, 8
          %s480 = scalar_lea.vmem %s8, %s479
        $region52: #{tpu_custom_call.1} parent=15 // pred_fallthru
          _
      $region16: #{tpu_custom_call.1} parent=5 // pred_fallthru
        _
      %p481 = scmp.le.s32.totalorder 1, %s21
      %p482 = scmp.lt.s32.totalorder %s21, 4
      %p483 = pnand %p481, %p482
      %p484 = pneg %p483
      // Predicated region
      $region53: #{tpu_custom_call.1} parent=5 // pred_check
        _
      $region54: #{tpu_custom_call.1} parent=5 // pred_check_branch
        %486 = sbr.rel (%p483) target = $region56
      $region55: #{tpu_custom_call.1} parent=5 // pred_region
        %s487 = ssub.s32 %s21, 1
        %s488 = sand.u32 %s191, 1
        %s489 = scalar_lea.sflag [#allocation6], %s488
        %s490 = sand.u32 %s191, 1
        %s491 = smul.addr %s490, 32
        %s492 = scalar_lea.vmem [#allocation5], %s491
        // Predicated region
        $region57: #{tpu_custom_call.1} parent=55 // pred_check
          %p493 = pneg %p204
        $region58: #{tpu_custom_call.1} parent=55 // pred_check_branch
          %495 = sbr.rel (%p493) target = $region60
        $region59: #{tpu_custom_call.1} parent=55 // pred_region
          %496 = dma.done %s489, 512
        $region60: #{tpu_custom_call.1} parent=55 // pred_fallthru
          _
        %s497 = sadd.s32 %s31, %s33
        %s498 = smul.u32 8, %s497
        %p499 = scmp.lt.s32.totalorder %s32, 2
        %s500 = scalar_select %p499, %s32, 2
        %p501 = scmp.lt.s32.totalorder %s498, 7
        %s502 = scalar_select %p501, %s498, 7
        %s503 = smul.addr %s500, 8
        %s504 = sadd.s32 %s502, %s503
        %s505 = smul.addr %s504, 4
        %s506 = scalar_lea.vmem %s0, %s505
        %p507 = pneg %p70
        %p508 = pneg %p67
        %s509 = sadd.s32 %s31, %s33
        %s510 = smul.u32 8, %s509
        %p511 = scmp.lt.s32.totalorder %s32, 2
        %s512 = scalar_select %p511, %s32, 2
        %p513 = scmp.lt.s32.totalorder %s510, 7
        %s514 = scalar_select %p513, %s510, 7
        %s515 = smul.addr %s512, 8
        %s516 = sadd.s32 %s514, %s515
        %s517 = smul.addr %s516, 8
        %s518 = scalar_lea.vmem %s1, %s517
        %p519 = pneg %p100
        %p520 = pneg %p97
        %p521 = scmp.lt.s32.totalorder %s32, 2
        %s522 = scalar_select %p521, %s32, 2
        %s523 = smul.addr %s522, 8
        %s524 = scalar_lea.vmem %s2, %s523
        %p525 = pneg %p126
        %p526 = pneg %p123
        %p527 = scmp.lt.s32.totalorder %s32, 2
        %s528 = scalar_select %p527, %s32, 2
        %s529 = smul.addr %s528, 4
        %s530 = smul.addr %s529, 8
        %s531 = scalar_lea.vmem %s3, %s530
        %p532 = pneg %p152
        %p533 = pneg %p149
        %p534 = scmp.lt.s32.totalorder %s32, 2
        %s535 = scalar_select %p534, %s32, 2
        %s536 = smul.addr %s535, 4
        %s537 = smul.addr %s536, 8
        %s538 = scalar_lea.vmem %s4, %s537
        %p539 = pneg %p178
        %p540 = pneg %p175
        %s541 = sand.u32 %s191, 1
        %s542 = scalar_lea.sflag [#allocation6], %s541
        %s543 = sand.u32 %s191, 1
        %s544 = smul.addr %s543, 32
        %s545 = scalar_lea.vmem [#allocation5], %s544
        %p546 = pneg %p204
        %p547 = pneg %p201
        %p548 = scmp.lt.s32.totalorder %s32, 2
        %s549 = scalar_select %p548, %s32, 2
        %s550 = smul.addr %s549, 4
        %s551 = smul.addr %s550, 8
        %s552 = scalar_lea.vmem %s6, %s551
        %p553 = pneg %p230
        %p554 = pneg %p227
        %p555 = scmp.lt.s32.totalorder %s32, 2
        %s556 = scalar_select %p555, %s32, 2
        %s557 = smul.addr %s556, 8
        %s558 = scalar_lea.vmem %s7, %s557
        %p559 = pneg %p256
        %p560 = pneg %p253
        %p561 = scmp.lt.s32.totalorder %s32, 2
        %s562 = scalar_select %p561, %s32, 2
        %s563 = smul.addr %s562, 8
        %s564 = scalar_lea.vmem %s8, %s563
        %p565 = pneg %p282
        %p566 = pneg %p279
        %p567 = pneg %p310
        %p568 = pneg %p307
        %p569 = scmp.lt.s32.totalorder %s31, 0
        %s570 = scalar_select %p569, %s31, 0
        %p571 = scmp.lt.s32.totalorder %s32, 2
        %s572 = scalar_select %p571, %s32, 2
        %s573 = smul.addr %s570, 3
        %s574 = sadd.s32 %s572, %s573
        %s575 = scalar_lea.vmem %s9, %s574
        %p576 = pneg %p338
        %p577 = pneg %p335
        %p578 = scmp.lt.s32.totalorder %s31, 0
        %s579 = scalar_select %p578, %s31, 0
        %p580 = scmp.lt.s32.totalorder %s32, 2
        %s581 = scalar_select %p580, %s32, 2
        %s582 = smul.addr %s579, 3
        %s583 = sadd.s32 %s581, %s582
        %s584 = scalar_lea.vmem %s10, %s583
        %p585 = pneg %p366
        %p586 = pneg %p363
        %p587 = scmp.lt.s32.totalorder %s31, 0
        %s588 = scalar_select %p587, %s31, 0
        %p589 = scmp.lt.s32.totalorder %s32, 2
        %s590 = scalar_select %p589, %s32, 2
        %s591 = smul.addr %s588, 3
        %s592 = sadd.s32 %s590, %s591
        %s593 = scalar_lea.vmem %s11, %s592
        %s594 = sadd.s32 %s31, %s33
        %s595 = smul.u32 8, %s594
        %p596 = scmp.lt.s32.totalorder %s32, 2
        %s597 = scalar_select %p596, %s32, 2
        %p598 = scmp.lt.s32.totalorder %s595, 7
        %s599 = scalar_select %p598, %s595, 7
        %s600 = smul.addr %s597, 8
        %s601 = sadd.s32 %s599, %s600
        %s602 = smul.addr %s601, 4
        %s603 = scalar_lea.vmem %s0, %s602
        %s604 = sadd.s32 %s31, %s33
        %s605 = smul.u32 8, %s604
        %s606 = sadd.s32 %s31, %s33
        %s607 = smul.u32 8, %s606
        %p608 = scmp.lt.s32.totalorder %s32, 2
        %s609 = scalar_select %p608, %s32, 2
        %p610 = scmp.lt.s32.totalorder %s607, 7
        %s611 = scalar_select %p610, %s607, 7
        %s612 = smul.addr %s609, 8
        %s613 = sadd.s32 %s611, %s612
        %s614 = smul.addr %s613, 8
        %s615 = scalar_lea.vmem %s1, %s614
        %s616 = sadd.s32 %s31, %s33
        %s617 = smul.u32 8, %s616
        %p618 = scmp.lt.s32.totalorder %s32, 2
        %s619 = scalar_select %p618, %s32, 2
        %s620 = smul.addr %s619, 8
        %s621 = scalar_lea.vmem %s2, %s620
        %p622 = scmp.lt.s32.totalorder %s32, 2
        %s623 = scalar_select %p622, %s32, 2
        %s624 = smul.addr %s623, 4
        %s625 = smul.addr %s624, 8
        %s626 = scalar_lea.vmem %s3, %s625
        %p627 = scmp.lt.s32.totalorder %s32, 2
        %s628 = scalar_select %p627, %s32, 2
        %s629 = smul.addr %s628, 4
        %s630 = smul.addr %s629, 8
        %s631 = scalar_lea.vmem %s4, %s630
        %p632 = scmp.lt.s32.totalorder %s32, 2
        %s633 = scalar_select %p632, %s32, 2
        %s634 = smul.addr %s633, 4
        %s635 = smul.addr %s634, 8
        %s636 = scalar_lea.vmem %s6, %s635
        %p637 = scmp.lt.s32.totalorder %s32, 2
        %s638 = scalar_select %p637, %s32, 2
        %s639 = smul.addr %s638, 8
        %s640 = scalar_lea.vmem %s7, %s639
        %p641 = scmp.lt.s32.totalorder %s32, 2
        %s642 = scalar_select %p641, %s32, 2
        %s643 = smul.addr %s642, 8
        %s644 = scalar_lea.vmem %s8, %s643
        %p645 = scmp.lt.s32.totalorder %s31, 0
        %s646 = scalar_select %p645, %s31, 0
        %p647 = scmp.lt.s32.totalorder %s32, 2
        %s648 = scalar_select %p647, %s32, 2
        %s649 = smul.addr %s646, 3
        %s650 = sadd.s32 %s648, %s649
        %s651 = scalar_lea.vmem %s9, %s650
        %p652 = scmp.lt.s32.totalorder %s31, 0
        %s653 = scalar_select %p652, %s31, 0
        %p654 = scmp.lt.s32.totalorder %s32, 2
        %s655 = scalar_select %p654, %s32, 2
        %s656 = smul.addr %s653, 3
        %s657 = sadd.s32 %s655, %s656
        %s658 = scalar_lea.vmem %s10, %s657
        %p659 = scmp.lt.s32.totalorder %s31, 0
        %s660 = scalar_select %p659, %s31, 0
        %p661 = scmp.lt.s32.totalorder %s32, 2
        %s662 = scalar_select %p661, %s32, 2
        %s663 = smul.addr %s660, 3
        %s664 = sadd.s32 %s662, %s663
        %s665 = scalar_lea.vmem %s11, %s664
        %p666 = scmp.eq.s32.totalorder %s33, 0
        // Predicated region
        $region61: #{tpu_custom_call.1} parent=55 // pred_check
          %p667 = pneg %p666
        $region62: #{tpu_custom_call.1} parent=55 // pred_check_branch
          %669 = sbr.rel (%p667) target = $region64
        $region63: #{tpu_custom_call.1} parent=55 // pred_region
          %vm670 = vcmask 7168
          %671 = vst.msk [vmem:[#allocation2] sm:$0xff] %vm670, 0.0
          %672 = vst.msk [vmem:[#allocation3] sm:$0xff] %vm670, 0.0
          %673 = vst.msk [vmem:[#allocation4] sm:$0xff] %vm670, 0.0
        $region64: #{tpu_custom_call.1} parent=55 // pred_fallthru
          _
        %v674 = vld [vmem:[%s603] sm:$0xff]
        %v675 = vld [vmem:[%s603 + $0x8] sm:$0xff]
        %v676 = vld [vmem:[%s603 + $0x10] sm:$0xff]
        %v677 = vld [vmem:[%s603 + $0x18] sm:$0xff]
        %v678 = vld [vmem:[%s615] sm:$0xff]
        %v679 = vld [vmem:[%s615 + $0x8] sm:$0xff]
        %v680 = vld [vmem:[%s615 + $0x10] sm:$0xff]
        %v681 = vld [vmem:[%s615 + $0x18] sm:$0xff]
        %v682 = vld [vmem:[%s615 + $0x20] sm:$0xff]
        %v683 = vld [vmem:[%s615 + $0x28] sm:$0xff]
        %v684 = vld [vmem:[%s615 + $0x30] sm:$0xff]
        %v685 = vld [vmem:[%s615 + $0x38] sm:$0xff]
        %v686 = vld [vmem:[%s626] sm:$0xff]
        %v687 = vld [vmem:[%s626 + $0x8] sm:$0xff]
        %v688 = vld [vmem:[%s626 + $0x10] sm:$0xff]
        %v689 = vld [vmem:[%s626 + $0x18] sm:$0xff]
        %v690 = vld [vmem:[%s631] sm:$0xff]
        %v691 = vld [vmem:[%s631 + $0x8] sm:$0xff]
        %v692 = vld [vmem:[%s631 + $0x10] sm:$0xff]
        %v693 = vld [vmem:[%s631 + $0x18] sm:$0xff]
        %v694 = vld [vmem:[%s492] sm:$0xff]
        %v695 = vld [vmem:[%s492 + $0x8] sm:$0xff]
        %v696 = vld [vmem:[%s492 + $0x10] sm:$0xff]
        %v697 = vld [vmem:[%s492 + $0x18] sm:$0xff]
        %v698 = vld [vmem:[%s636] sm:$0xff]
        %v699 = vld [vmem:[%s636 + $0x8] sm:$0xff]
        %v700 = vld [vmem:[%s636 + $0x10] sm:$0xff]
        %v701 = vld [vmem:[%s636 + $0x18] sm:$0xff]
        %v702 = vld [vmem:[%s640] sm:$0xff]
        %v703 = vld [vmem:[%s644] sm:$0xff]
        %s704 = sadd.s32 %s31, %s33
        %s705 = smul.u32 %s704, 1024
        %v706 = vlaneseq
        %v707 = vand.u32 %v706, 127
        %v708 = vadd.s32 %v707, 128
        %v709 = vadd.s32 %v707, 256
        %v710 = vadd.s32 %v707, 384
        %v711 = vadd.s32 %v707, 512
        %v712 = vadd.s32 %v707, 640
        %v713 = vadd.s32 %v707, 768
        %v714 = vadd.s32 %v707, 896
        %v715 = vstv %s705
        %v716 = vadd.s32 %v707, %v715
        %v717 = vadd.s32 %v708, %v715
        %v718 = vadd.s32 %v709, %v715
        %v719 = vadd.s32 %v710, %v715
        %v720 = vadd.s32 %v711, %v715
        %v721 = vadd.s32 %v712, %v715
        %v722 = vadd.s32 %v713, %v715
        %v723 = vadd.s32 %v714, %v715
        %v724 = vcvt.s32.f32 %v716
        %v725 = vcvt.s32.f32 %v717
        %v726 = vcvt.s32.f32 %v718
        %v727 = vcvt.s32.f32 %v719
        %v728 = vcvt.s32.f32 %v720
        %v729 = vcvt.s32.f32 %v721
        %v730 = vcvt.s32.f32 %v722
        %v731 = vcvt.s32.f32 %v723
        %v732 = vrcp.pop 32.0
        %v733 = vmul.f32 %v724, %v732
        %v734 = vmul.f32 %v725, %v732
        %v735 = vmul.f32 %v726, %v732
        %v736 = vmul.f32 %v727, %v732
        %v737 = vmul.f32 %v728, %v732
        %v738 = vmul.f32 %v729, %v732
        %v739 = vmul.f32 %v730, %v732
        %v740 = vmul.f32 %v731, %v732
        %v741 = vfloor.f32 %v733
        %v742 = vfloor.f32 %v734
        %v743 = vfloor.f32 %v735
        %v744 = vfloor.f32 %v736
        %v745 = vfloor.f32 %v737
        %v746 = vfloor.f32 %v738
        %v747 = vfloor.f32 %v739
        %v748 = vfloor.f32 %v740
        %v749 = vmul.f32 %v741, 32.0
        %v750 = vmul.f32 %v742, 32.0
        %v751 = vmul.f32 %v743, 32.0
        %v752 = vmul.f32 %v744, 32.0
        %v753 = vmul.f32 %v745, 32.0
        %v754 = vmul.f32 %v746, 32.0
        %v755 = vmul.f32 %v747, 32.0
        %v756 = vmul.f32 %v748, 32.0
        %v757 = vsub.f32 %v724, %v749
        %v758 = vsub.f32 %v725, %v750
        %v759 = vsub.f32 %v726, %v751
        %v760 = vsub.f32 %v727, %v752
        %v761 = vsub.f32 %v728, %v753
        %v762 = vsub.f32 %v729, %v754
        %v763 = vsub.f32 %v730, %v755
        %v764 = vsub.f32 %v731, %v756
        %v765 = vmul.f32 %v757, 0.0078125
        %v766 = vmul.f32 %v758, 0.0078125
        %v767 = vmul.f32 %v759, 0.0078125
        %v768 = vmul.f32 %v760, 0.0078125
        %v769 = vmul.f32 %v761, 0.0078125
        %v770 = vmul.f32 %v762, 0.0078125
        %v771 = vmul.f32 %v763, 0.0078125
        %v772 = vmul.f32 %v764, 0.0078125
        %v773 = vmul.f32 %v741, 0.0078125
        %v774 = vmul.f32 %v742, 0.0078125
        %v775 = vmul.f32 %v743, 0.0078125
        %v776 = vmul.f32 %v744, 0.0078125
        %v777 = vmul.f32 %v745, 0.0078125
        %v778 = vmul.f32 %v746, 0.0078125
        %v779 = vmul.f32 %v747, 0.0078125
        %v780 = vmul.f32 %v748, 0.0078125
        %v785 = vcombine.high %v674, %v674
        %v786 = vcombine.high %v675, %v675
        %v787 = vcombine.high %v676, %v676
        %v788 = vcombine.high %v677, %v677
        %vm793 = vcmask 1043456
        %v794 = vsel %vm793, %v674, %v765
        %v795 = vsel %vm793, %v785, %v766
        %v796 = vsel %vm793, %v675, %v767
        %v797 = vsel %vm793, %v786, %v768
        %v798 = vsel %vm793, %v676, %v769
        %v799 = vsel %vm793, %v787, %v770
        %v800 = vsel %vm793, %v677, %v771
        %v801 = vsel %vm793, %v788, %v772
        %vm802 = vcmask 1044480
        %v803 = vsel %vm802, %v794, %v773
        %v804 = vsel %vm802, %v795, %v774
        %v805 = vsel %vm802, %v796, %v775
        %v806 = vsel %vm802, %v797, %v776
        %v807 = vsel %vm802, %v798, %v777
        %v808 = vsel %vm802, %v799, %v778
        %v809 = vsel %vm802, %v800, %v779
        %v810 = vsel %vm802, %v801, %v780
        %812 = vset.pattern.permute.xlu0 0
        %813 = vperm.xlu0 %812, %v690
        %v814 = vpop.permute.xlu0 %813
        %817 = vset.pattern.permute.xlu0 0
        %818 = vperm.xlu0 %817, %v691
        %v819 = vpop.permute.xlu0 %818
        %822 = vset.pattern.permute.xlu0 0
        %823 = vperm.xlu0 %822, %v692
        %v824 = vpop.permute.xlu0 %823
        %827 = vset.pattern.permute.xlu0 0
        %828 = vperm.xlu0 %827, %v693
        %v829 = vpop.permute.xlu0 %828
        %vm831 = vcmask 48128
        %v833 = vsel %vm831, %v686, 0
        %v836 = vsel %vm831, %v687, 0
        %v839 = vsel %vm831, %v688, 0
        %v842 = vsel %vm831, %v689, 0
        %vm844 = vcmask 1045504
        %v846 = vsel %vm844, %v803, 0
        %v849 = vsel %vm844, %v804, 0
        %v852 = vsel %vm844, %v805, 0
        %v855 = vsel %vm844, %v806, 0
        %v858 = vsel %vm844, %v807, 0
        %v861 = vsel %vm844, %v808, 0
        %v864 = vsel %vm844, %v809, 0
        %v867 = vsel %vm844, %v810, 0
        %869 = vmatprep.subr.mxu0 0.0
        %870 = vmatpush1.msra.mxu0 0.0
        %871 = vmatprep.subr.mxu0 0.0
        %872 = vmatpush1.msra.mxu0 0.0
        %873 = vmatprep.subr.mxu0 0.0
        %874 = vmatpush1.msra.mxu0 0.0
        %875 = vmatprep.subr.mxu0 0.0
        %876 = vmatpush1.msra.mxu0 0.0
        %877 = vmatprep.subr.mxu0 0.0
        %878 = vmatpush1.msra.mxu0 0.0
        %879 = vmatprep.subr.mxu0 0.0
        %880 = vmatpush1.msra.mxu0 0.0
        %881 = vmatprep.subr.mxu0 0.0
        %882 = vmatpush1.msra.mxu0 0.0
        %883 = vmatprep.subr.mxu0 0.0
        %884 = vmatpush1.msra.mxu0 0.0
        %885 = vmatprep.subr.mxu0 0.0
        %886 = vmatpush1.msra.mxu0 0.0
        %887 = vmatprep.subr.mxu0 0.0
        %888 = vmatpush1.msra.mxu0 0.0
        %889 = vmatprep.subr.mxu0 0.0
        %890 = vmatpush1.msra.mxu0 0.0
        %891 = vmatprep.subr.mxu0 0.0
        %892 = vmatpush1.msra.mxu0 0.0
        %893 = vmatprep.subr.mxu0 0.0
        %894 = vmatpush1.msra.mxu0 0.0
        %895 = vmatprep.subr.mxu0 0.0
        %896 = vmatpush1.msra.mxu0 0.0
        %897 = vmatprep.subr.mxu0 0.0
        %898 = vmatpush1.msra.mxu0 0.0
        %899 = vmatprep.subr.mxu0 %v849
        %900 = vmatpush1.msra.mxu0 %v846
        %901 = vmatprep.subr.mxu0 0.0
        %902 = vmatpush2.msra.mxu0 0.0
        %903 = vmatprep.subr.mxu0 0.0
        %904 = vmatpush2.msra.mxu0 0.0
        %905 = vmatprep.subr.mxu0 0.0
        %906 = vmatpush2.msra.mxu0 0.0
        %907 = vmatprep.subr.mxu0 0.0
        %908 = vmatpush2.msra.mxu0 0.0
        %909 = vmatprep.subr.mxu0 0.0
        %910 = vmatpush2.msra.mxu0 0.0
        %911 = vmatprep.subr.mxu0 0.0
        %912 = vmatpush2.msra.mxu0 0.0
        %913 = vmatprep.subr.mxu0 0.0
        %914 = vmatpush2.msra.mxu0 0.0
        %915 = vmatprep.subr.mxu0 0.0
        %916 = vmatpush2.msra.mxu0 0.0
        %917 = vmatprep.subr.mxu0 0.0
        %918 = vmatpush2.msra.mxu0 0.0
        %919 = vmatprep.subr.mxu0 0.0
        %920 = vmatpush2.msra.mxu0 0.0
        %921 = vmatprep.subr.mxu0 0.0
        %922 = vmatpush2.msra.mxu0 0.0
        %923 = vmatprep.subr.mxu0 0.0
        %924 = vmatpush2.msra.mxu0 0.0
        %925 = vmatprep.subr.mxu0 0.0
        %926 = vmatpush2.msra.mxu0 0.0
        %927 = vmatprep.subr.mxu0 0.0
        %928 = vmatpush2.msra.mxu0 0.0
        %929 = vmatprep.subr.mxu0 0.0
        %930 = vmatpush2.msra.mxu0 0.0
        %931 = vmatprep.subr.mxu0 0.0
        %932 = vmatpush2.msra.mxu0 0.0
        %933 = vmatprep.mubr.f32.mxu0 0.0
        %934 = vmatmul.mubr.f32.gmra.mxu0 %v833
        %v935 = vpop.f32.mrf.mxu0
        %v936 = vadd.f32 %v814, %v935
        %v937 = vpop.f32.mrf.mxu0
        %v938 = vadd.f32 %v814, %v937
        %939 = vmatprep.mubr.f32.mxu0 0.0
        %940 = vmatmul.mubr.f32.gmra.mxu0 %v836
        %v941 = vpop.f32.mrf.mxu0
        %v942 = vadd.f32 %v819, %v941
        %v943 = vpop.f32.mrf.mxu0
        %v944 = vadd.f32 %v819, %v943
        %945 = vmatprep.mubr.f32.mxu0 0.0
        %946 = vmatmul.mubr.f32.gmra.mxu0 %v839
        %v947 = vpop.f32.mrf.mxu0
        %v948 = vadd.f32 %v824, %v947
        %v949 = vpop.f32.mrf.mxu0
        %v950 = vadd.f32 %v824, %v949
        %951 = vmatprep.mubr.f32.mxu0 0.0
        %952 = vmatmul.mubr.f32.gmra.mxu0 %v842
        %v953 = vpop.f32.mrf.mxu0
        %v954 = vadd.f32 %v829, %v953
        %v955 = vpop.f32.mrf.mxu0
        %v956 = vadd.f32 %v829, %v955
        %957 = vdwg.mxu0
        %958 = vmatprep.subr.mxu0 0.0
        %959 = vmatpush1.msra.mxu0 0.0
        %960 = vmatprep.subr.mxu0 0.0
        %961 = vmatpush1.msra.mxu0 0.0
        %962 = vmatprep.subr.mxu0 0.0
        %963 = vmatpush1.msra.mxu0 0.0
        %964 = vmatprep.subr.mxu0 0.0
        %965 = vmatpush1.msra.mxu0 0.0
        %966 = vmatprep.subr.mxu0 0.0
        %967 = vmatpush1.msra.mxu0 0.0
        %968 = vmatprep.subr.mxu0 0.0
        %969 = vmatpush1.msra.mxu0 0.0
        %970 = vmatprep.subr.mxu0 0.0
        %971 = vmatpush1.msra.mxu0 0.0
        %972 = vmatprep.subr.mxu0 0.0
        %973 = vmatpush1.msra.mxu0 0.0
        %974 = vmatprep.subr.mxu0 0.0
        %975 = vmatpush1.msra.mxu0 0.0
        %976 = vmatprep.subr.mxu0 0.0
        %977 = vmatpush1.msra.mxu0 0.0
        %978 = vmatprep.subr.mxu0 0.0
        %979 = vmatpush1.msra.mxu0 0.0
        %980 = vmatprep.subr.mxu0 0.0
        %981 = vmatpush1.msra.mxu0 0.0
        %982 = vmatprep.subr.mxu0 0.0
        %983 = vmatpush1.msra.mxu0 0.0
        %984 = vmatprep.subr.mxu0 0.0
        %985 = vmatpush1.msra.mxu0 0.0
        %986 = vmatprep.subr.mxu0 0.0
        %987 = vmatpush1.msra.mxu0 0.0
        %988 = vmatprep.subr.mxu0 %v855
        %989 = vmatpush1.msra.mxu0 %v852
        %990 = vmatprep.subr.mxu0 0.0
        %991 = vmatpush2.msra.mxu0 0.0
        %992 = vmatprep.subr.mxu0 0.0
        %993 = vmatpush2.msra.mxu0 0.0
        %994 = vmatprep.subr.mxu0 0.0
        %995 = vmatpush2.msra.mxu0 0.0
        %996 = vmatprep.subr.mxu0 0.0
        %997 = vmatpush2.msra.mxu0 0.0
        %998 = vmatprep.subr.mxu0 0.0
        %999 = vmatpush2.msra.mxu0 0.0
        %1000 = vmatprep.subr.mxu0 0.0
        %1001 = vmatpush2.msra.mxu0 0.0
        %1002 = vmatprep.subr.mxu0 0.0
        %1003 = vmatpush2.msra.mxu0 0.0
        %1004 = vmatprep.subr.mxu0 0.0
        %1005 = vmatpush2.msra.mxu0 0.0
        %1006 = vmatprep.subr.mxu0 0.0
        %1007 = vmatpush2.msra.mxu0 0.0
        %1008 = vmatprep.subr.mxu0 0.0
        %1009 = vmatpush2.msra.mxu0 0.0
        %1010 = vmatprep.subr.mxu0 0.0
        %1011 = vmatpush2.msra.mxu0 0.0
        %1012 = vmatprep.subr.mxu0 0.0
        %1013 = vmatpush2.msra.mxu0 0.0
        %1014 = vmatprep.subr.mxu0 0.0
        %1015 = vmatpush2.msra.mxu0 0.0
        %1016 = vmatprep.subr.mxu0 0.0
        %1017 = vmatpush2.msra.mxu0 0.0
        %1018 = vmatprep.subr.mxu0 0.0
        %1019 = vmatpush2.msra.mxu0 0.0
        %1020 = vmatprep.subr.mxu0 0.0
        %1021 = vmatpush2.msra.mxu0 0.0
        %1022 = vmatprep.mubr.f32.mxu0 0.0
        %1023 = vmatmul.mubr.f32.gmra.mxu0 %v833
        %v1024 = vpop.f32.mrf.mxu0
        %v1025 = vadd.f32 %v814, %v1024
        %v1026 = vpop.f32.mrf.mxu0
        %v1027 = vadd.f32 %v814, %v1026
        %1028 = vmatprep.mubr.f32.mxu0 0.0
        %1029 = vmatmul.mubr.f32.gmra.mxu0 %v836
        %v1030 = vpop.f32.mrf.mxu0
        %v1031 = vadd.f32 %v819, %v1030
        %v1032 = vpop.f32.mrf.mxu0
        %v1033 = vadd.f32 %v819, %v1032
        %1034 = vmatprep.mubr.f32.mxu0 0.0
        %1035 = vmatmul.mubr.f32.gmra.mxu0 %v839
        %v1036 = vpop.f32.mrf.mxu0
        %v1037 = vadd.f32 %v824, %v1036
        %v1038 = vpop.f32.mrf.mxu0
        %v1039 = vadd.f32 %v824, %v1038
        %1040 = vmatprep.mubr.f32.mxu0 0.0
        %1041 = vmatmul.mubr.f32.gmra.mxu0 %v842
        %v1042 = vpop.f32.mrf.mxu0
        %v1043 = vadd.f32 %v829, %v1042
        %v1044 = vpop.f32.mrf.mxu0
        %v1045 = vadd.f32 %v829, %v1044
        %1046 = vdwg.mxu0
        %1047 = vmatprep.subr.mxu0 0.0
        %1048 = vmatpush1.msra.mxu0 0.0
        %1049 = vmatprep.subr.mxu0 0.0
        %1050 = vmatpush1.msra.mxu0 0.0
        %1051 = vmatprep.subr.mxu0 0.0
        %1052 = vmatpush1.msra.mxu0 0.0
        %1053 = vmatprep.subr.mxu0 0.0
        %1054 = vmatpush1.msra.mxu0 0.0
        %1055 = vmatprep.subr.mxu0 0.0
        %1056 = vmatpush1.msra.mxu0 0.0
        %1057 = vmatprep.subr.mxu0 0.0
        %1058 = vmatpush1.msra.mxu0 0.0
        %1059 = vmatprep.subr.mxu0 0.0
        %1060 = vmatpush1.msra.mxu0 0.0
        %1061 = vmatprep.subr.mxu0 0.0
        %1062 = vmatpush1.msra.mxu0 0.0
        %1063 = vmatprep.subr.mxu0 0.0
        %1064 = vmatpush1.msra.mxu0 0.0
        %1065 = vmatprep.subr.mxu0 0.0
        %1066 = vmatpush1.msra.mxu0 0.0
        %1067 = vmatprep.subr.mxu0 0.0
        %1068 = vmatpush1.msra.mxu0 0.0
        %1069 = vmatprep.subr.mxu0 0.0
        %1070 = vmatpush1.msra.mxu0 0.0
        %1071 = vmatprep.subr.mxu0 0.0
        %1072 = vmatpush1.msra.mxu0 0.0
        %1073 = vmatprep.subr.mxu0 0.0
        %1074 = vmatpush1.msra.mxu0 0.0
        %1075 = vmatprep.subr.mxu0 0.0
        %1076 = vmatpush1.msra.mxu0 0.0
        %1077 = vmatprep.subr.mxu0 %v861
        %1078 = vmatpush1.msra.mxu0 %v858
        %1079 = vmatprep.subr.mxu0 0.0
        %1080 = vmatpush2.msra.mxu0 0.0
        %1081 = vmatprep.subr.mxu0 0.0
        %1082 = vmatpush2.msra.mxu0 0.0
        %1083 = vmatprep.subr.mxu0 0.0
        %1084 = vmatpush2.msra.mxu0 0.0
        %1085 = vmatprep.subr.mxu0 0.0
        %1086 = vmatpush2.msra.mxu0 0.0
        %1087 = vmatprep.subr.mxu0 0.0
        %1088 = vmatpush2.msra.mxu0 0.0
        %1089 = vmatprep.subr.mxu0 0.0
        %1090 = vmatpush2.msra.mxu0 0.0
        %1091 = vmatprep.subr.mxu0 0.0
        %1092 = vmatpush2.msra.mxu0 0.0
        %1093 = vmatprep.subr.mxu0 0.0
        %1094 = vmatpush2.msra.mxu0 0.0
        %1095 = vmatprep.subr.mxu0 0.0
        %1096 = vmatpush2.msra.mxu0 0.0
        %1097 = vmatprep.subr.mxu0 0.0
        %1098 = vmatpush2.msra.mxu0 0.0
        %1099 = vmatprep.subr.mxu0 0.0
        %1100 = vmatpush2.msra.mxu0 0.0
        %1101 = vmatprep.subr.mxu0 0.0
        %1102 = vmatpush2.msra.mxu0 0.0
        %1103 = vmatprep.subr.mxu0 0.0
        %1104 = vmatpush2.msra.mxu0 0.0
        %1105 = vmatprep.subr.mxu0 0.0
        %1106 = vmatpush2.msra.mxu0 0.0
        %1107 = vmatprep.subr.mxu0 0.0
        %1108 = vmatpush2.msra.mxu0 0.0
        %1109 = vmatprep.subr.mxu0 0.0
        %1110 = vmatpush2.msra.mxu0 0.0
        %1111 = vmatprep.mubr.f32.mxu0 0.0
        %1112 = vmatmul.mubr.f32.gmra.mxu0 %v833
        %v1113 = vpop.f32.mrf.mxu0
        %v1114 = vadd.f32 %v814, %v1113
        %v1115 = vpop.f32.mrf.mxu0
        %v1116 = vadd.f32 %v814, %v1115
        %1117 = vmatprep.mubr.f32.mxu0 0.0
        %1118 = vmatmul.mubr.f32.gmra.mxu0 %v836
        %v1119 = vpop.f32.mrf.mxu0
        %v1120 = vadd.f32 %v819, %v1119
        %v1121 = vpop.f32.mrf.mxu0
        %v1122 = vadd.f32 %v819, %v1121
        %1123 = vmatprep.mubr.f32.mxu0 0.0
        %1124 = vmatmul.mubr.f32.gmra.mxu0 %v839
        %v1125 = vpop.f32.mrf.mxu0
        %v1126 = vadd.f32 %v824, %v1125
        %v1127 = vpop.f32.mrf.mxu0
        %v1128 = vadd.f32 %v824, %v1127
        %1129 = vmatprep.mubr.f32.mxu0 0.0
        %1130 = vmatmul.mubr.f32.gmra.mxu0 %v842
        %v1131 = vpop.f32.mrf.mxu0
        %v1132 = vadd.f32 %v829, %v1131
        %v1133 = vpop.f32.mrf.mxu0
        %v1134 = vadd.f32 %v829, %v1133
        %1135 = vdwg.mxu0
        %1136 = vmatprep.subr.mxu0 0.0
        %1137 = vmatpush1.msra.mxu0 0.0
        %1138 = vmatprep.subr.mxu0 0.0
        %1139 = vmatpush1.msra.mxu0 0.0
        %1140 = vmatprep.subr.mxu0 0.0
        %1141 = vmatpush1.msra.mxu0 0.0
        %1142 = vmatprep.subr.mxu0 0.0
        %1143 = vmatpush1.msra.mxu0 0.0
        %1144 = vmatprep.subr.mxu0 0.0
        %1145 = vmatpush1.msra.mxu0 0.0
        %1146 = vmatprep.subr.mxu0 0.0
        %1147 = vmatpush1.msra.mxu0 0.0
        %1148 = vmatprep.subr.mxu0 0.0
        %1149 = vmatpush1.msra.mxu0 0.0
        %1150 = vmatprep.subr.mxu0 0.0
        %1151 = vmatpush1.msra.mxu0 0.0
        %1152 = vmatprep.subr.mxu0 0.0
        %1153 = vmatpush1.msra.mxu0 0.0
        %1154 = vmatprep.subr.mxu0 0.0
        %1155 = vmatpush1.msra.mxu0 0.0
        %1156 = vmatprep.subr.mxu0 0.0
        %1157 = vmatpush1.msra.mxu0 0.0
        %1158 = vmatprep.subr.mxu0 0.0
        %1159 = vmatpush1.msra.mxu0 0.0
        %1160 = vmatprep.subr.mxu0 0.0
        %1161 = vmatpush1.msra.mxu0 0.0
        %1162 = vmatprep.subr.mxu0 0.0
        %1163 = vmatpush1.msra.mxu0 0.0
        %1164 = vmatprep.subr.mxu0 0.0
        %1165 = vmatpush1.msra.mxu0 0.0
        %1166 = vmatprep.subr.mxu0 %v867
        %1167 = vmatpush1.msra.mxu0 %v864
        %1168 = vmatprep.subr.mxu0 0.0
        %1169 = vmatpush2.msra.mxu0 0.0
        %1170 = vmatprep.subr.mxu0 0.0
        %1171 = vmatpush2.msra.mxu0 0.0
        %1172 = vmatprep.subr.mxu0 0.0
        %1173 = vmatpush2.msra.mxu0 0.0
        %1174 = vmatprep.subr.mxu0 0.0
        %1175 = vmatpush2.msra.mxu0 0.0
        %1176 = vmatprep.subr.mxu0 0.0
        %1177 = vmatpush2.msra.mxu0 0.0
        %1178 = vmatprep.subr.mxu0 0.0
        %1179 = vmatpush2.msra.mxu0 0.0
        %1180 = vmatprep.subr.mxu0 0.0
        %1181 = vmatpush2.msra.mxu0 0.0
        %1182 = vmatprep.subr.mxu0 0.0
        %1183 = vmatpush2.msra.mxu0 0.0
        %1184 = vmatprep.subr.mxu0 0.0
        %1185 = vmatpush2.msra.mxu0 0.0
        %1186 = vmatprep.subr.mxu0 0.0
        %1187 = vmatpush2.msra.mxu0 0.0
        %1188 = vmatprep.subr.mxu0 0.0
        %1189 = vmatpush2.msra.mxu0 0.0
        %1190 = vmatprep.subr.mxu0 0.0
        %1191 = vmatpush2.msra.mxu0 0.0
        %1192 = vmatprep.subr.mxu0 0.0
        %1193 = vmatpush2.msra.mxu0 0.0
        %1194 = vmatprep.subr.mxu0 0.0
        %1195 = vmatpush2.msra.mxu0 0.0
        %1196 = vmatprep.subr.mxu0 0.0
        %1197 = vmatpush2.msra.mxu0 0.0
        %1198 = vmatprep.subr.mxu0 0.0
        %1199 = vmatpush2.msra.mxu0 0.0
        %1200 = vmatprep.mubr.f32.mxu0 0.0
        %1201 = vmatmul.mubr.f32.gmra.mxu0 %v833
        %v1202 = vpop.f32.mrf.mxu0
        %v1203 = vadd.f32 %v814, %v1202
        %v1204 = vpop.f32.mrf.mxu0
        %v1205 = vadd.f32 %v814, %v1204
        %1206 = vmatprep.mubr.f32.mxu0 0.0
        %1207 = vmatmul.mubr.f32.gmra.mxu0 %v836
        %v1208 = vpop.f32.mrf.mxu0
        %v1209 = vadd.f32 %v819, %v1208
        %v1210 = vpop.f32.mrf.mxu0
        %v1211 = vadd.f32 %v819, %v1210
        %1212 = vmatprep.mubr.f32.mxu0 0.0
        %1213 = vmatmul.mubr.f32.gmra.mxu0 %v839
        %v1214 = vpop.f32.mrf.mxu0
        %v1215 = vadd.f32 %v824, %v1214
        %v1216 = vpop.f32.mrf.mxu0
        %v1217 = vadd.f32 %v824, %v1216
        %1218 = vmatprep.mubr.f32.mxu0 0.0
        %1219 = vmatmul.mubr.f32.gmra.mxu0 %v842
        %v1220 = vpop.f32.mrf.mxu0
        %v1221 = vadd.f32 %v829, %v1220
        %v1222 = vpop.f32.mrf.mxu0
        %v1223 = vadd.f32 %v829, %v1222
        %1224 = vdwg.mxu0
        %v1225 = vmax.f32 %v936, 0.0
        %v1226 = vmax.f32 %v938, 0.0
        %v1227 = vmax.f32 %v1025, 0.0
        %v1228 = vmax.f32 %v1027, 0.0
        %v1229 = vmax.f32 %v1114, 0.0
        %v1230 = vmax.f32 %v1116, 0.0
        %v1231 = vmax.f32 %v1203, 0.0
        %v1232 = vmax.f32 %v1205, 0.0
        %v1233 = vmax.f32 %v942, 0.0
        %v1234 = vmax.f32 %v944, 0.0
        %v1235 = vmax.f32 %v1031, 0.0
        %v1236 = vmax.f32 %v1033, 0.0
        %v1237 = vmax.f32 %v1120, 0.0
        %v1238 = vmax.f32 %v1122, 0.0
        %v1239 = vmax.f32 %v1209, 0.0
        %v1240 = vmax.f32 %v1211, 0.0
        %v1241 = vmax.f32 %v948, 0.0
        %v1242 = vmax.f32 %v950, 0.0
        %v1243 = vmax.f32 %v1037, 0.0
        %v1244 = vmax.f32 %v1039, 0.0
        %v1245 = vmax.f32 %v1126, 0.0
        %v1246 = vmax.f32 %v1128, 0.0
        %v1247 = vmax.f32 %v1215, 0.0
        %v1248 = vmax.f32 %v1217, 0.0
        %v1249 = vmax.f32 %v954, 0.0
        %v1250 = vmax.f32 %v956, 0.0
        %v1251 = vmax.f32 %v1043, 0.0
        %v1252 = vmax.f32 %v1045, 0.0
        %v1253 = vmax.f32 %v1132, 0.0
        %v1254 = vmax.f32 %v1134, 0.0
        %v1255 = vmax.f32 %v1221, 0.0
        %v1256 = vmax.f32 %v1223, 0.0
        %1258 = vset.pattern.permute.xlu0 0
        %1259 = vperm.xlu0 %1258, %v698
        %v1260 = vpop.permute.xlu0 %1259
        %1263 = vset.pattern.permute.xlu0 0
        %1264 = vperm.xlu0 %1263, %v699
        %v1265 = vpop.permute.xlu0 %1264
        %1268 = vset.pattern.permute.xlu0 0
        %1269 = vperm.xlu0 %1268, %v700
        %v1270 = vpop.permute.xlu0 %1269
        %1273 = vset.pattern.permute.xlu0 0
        %1274 = vperm.xlu0 %1273, %v701
        %v1275 = vpop.permute.xlu0 %1274
        %vm1277 = vcmask 261120
        %v1279 = vsel %vm1277, %v694, 0
        %v1282 = vsel %vm1277, %v695, 0
        %v1285 = vsel %vm1277, %v696, 0
        %v1288 = vsel %vm1277, %v697, 0
        %1290 = vmatprep.subr.mxu0 0.0
        %1291 = vmatpush1.msra.mxu0 0.0
        %1292 = vmatprep.subr.mxu0 0.0
        %1293 = vmatpush1.msra.mxu0 0.0
        %1294 = vmatprep.subr.mxu0 0.0
        %1295 = vmatpush1.msra.mxu0 0.0
        %1296 = vmatprep.subr.mxu0 0.0
        %1297 = vmatpush1.msra.mxu0 0.0
        %1298 = vmatprep.subr.mxu0 0.0
        %1299 = vmatpush1.msra.mxu0 0.0
        %1300 = vmatprep.subr.mxu0 0.0
        %1301 = vmatpush1.msra.mxu0 0.0
        %1302 = vmatprep.subr.mxu0 0.0
        %1303 = vmatpush1.msra.mxu0 0.0
        %1304 = vmatprep.subr.mxu0 0.0
        %1305 = vmatpush1.msra.mxu0 0.0
        %1306 = vmatprep.subr.mxu0 0.0
        %1307 = vmatpush1.msra.mxu0 0.0
        %1308 = vmatprep.subr.mxu0 0.0
        %1309 = vmatpush1.msra.mxu0 0.0
        %1310 = vmatprep.subr.mxu0 0.0
        %1311 = vmatpush1.msra.mxu0 0.0
        %1312 = vmatprep.subr.mxu0 0.0
        %1313 = vmatpush1.msra.mxu0 0.0
        %1314 = vmatprep.subr.mxu0 %v1250
        %1315 = vmatpush1.msra.mxu0 %v1249
        %1316 = vmatprep.subr.mxu0 %v1242
        %1317 = vmatpush1.msra.mxu0 %v1241
        %1318 = vmatprep.subr.mxu0 %v1234
        %1319 = vmatpush1.msra.mxu0 %v1233
        %1320 = vmatprep.subr.mxu0 %v1226
        %1321 = vmatpush1.msra.mxu0 %v1225
        %1322 = vmatprep.subr.mxu0 0.0
        %1323 = vmatpush2.msra.mxu0 0.0
        %1324 = vmatprep.subr.mxu0 0.0
        %1325 = vmatpush2.msra.mxu0 0.0
        %1326 = vmatprep.subr.mxu0 0.0
        %1327 = vmatpush2.msra.mxu0 0.0
        %1328 = vmatprep.subr.mxu0 0.0
        %1329 = vmatpush2.msra.mxu0 0.0
        %1330 = vmatprep.subr.mxu0 0.0
        %1331 = vmatpush2.msra.mxu0 0.0
        %1332 = vmatprep.subr.mxu0 0.0
        %1333 = vmatpush2.msra.mxu0 0.0
        %1334 = vmatprep.subr.mxu0 0.0
        %1335 = vmatpush2.msra.mxu0 0.0
        %1336 = vmatprep.subr.mxu0 0.0
        %1337 = vmatpush2.msra.mxu0 0.0
        %1338 = vmatprep.subr.mxu0 0.0
        %1339 = vmatpush2.msra.mxu0 0.0
        %1340 = vmatprep.subr.mxu0 0.0
        %1341 = vmatpush2.msra.mxu0 0.0
        %1342 = vmatprep.subr.mxu0 0.0
        %1343 = vmatpush2.msra.mxu0 0.0
        %1344 = vmatprep.subr.mxu0 0.0
        %1345 = vmatpush2.msra.mxu0 0.0
        %1346 = vmatprep.subr.mxu0 0.0
        %1347 = vmatpush2.msra.mxu0 0.0
        %1348 = vmatprep.subr.mxu0 0.0
        %1349 = vmatpush2.msra.mxu0 0.0
        %1350 = vmatprep.subr.mxu0 0.0
        %1351 = vmatpush2.msra.mxu0 0.0
        %1352 = vmatprep.subr.mxu0 0.0
        %1353 = vmatpush2.msra.mxu0 0.0
        %1354 = vmatprep.mubr.f32.mxu0 0.0
        %1355 = vmatmul.mubr.f32.gmra.mxu0 %v1279
        %v1356 = vpop.f32.mrf.mxu0
        %v1357 = vadd.f32 %v1260, %v1356
        %v1358 = vpop.f32.mrf.mxu0
        %v1359 = vadd.f32 %v1260, %v1358
        %1360 = vmatprep.mubr.f32.mxu0 0.0
        %1361 = vmatmul.mubr.f32.gmra.mxu0 %v1282
        %v1362 = vpop.f32.mrf.mxu0
        %v1363 = vadd.f32 %v1265, %v1362
        %v1364 = vpop.f32.mrf.mxu0
        %v1365 = vadd.f32 %v1265, %v1364
        %1366 = vmatprep.mubr.f32.mxu0 0.0
        %1367 = vmatmul.mubr.f32.gmra.mxu0 %v1285
        %v1368 = vpop.f32.mrf.mxu0
        %v1369 = vadd.f32 %v1270, %v1368
        %v1370 = vpop.f32.mrf.mxu0
        %v1371 = vadd.f32 %v1270, %v1370
        %1372 = vmatprep.mubr.f32.mxu0 0.0
        %1373 = vmatmul.mubr.f32.gmra.mxu0 %v1288
        %v1374 = vpop.f32.mrf.mxu0
        %v1375 = vadd.f32 %v1275, %v1374
        %v1376 = vpop.f32.mrf.mxu0
        %v1377 = vadd.f32 %v1275, %v1376
        %1378 = vdwg.mxu0
        %1379 = vmatprep.subr.mxu0 0.0
        %1380 = vmatpush1.msra.mxu0 0.0
        %1381 = vmatprep.subr.mxu0 0.0
        %1382 = vmatpush1.msra.mxu0 0.0
        %1383 = vmatprep.subr.mxu0 0.0
        %1384 = vmatpush1.msra.mxu0 0.0
        %1385 = vmatprep.subr.mxu0 0.0
        %1386 = vmatpush1.msra.mxu0 0.0
        %1387 = vmatprep.subr.mxu0 0.0
        %1388 = vmatpush1.msra.mxu0 0.0
        %1389 = vmatprep.subr.mxu0 0.0
        %1390 = vmatpush1.msra.mxu0 0.0
        %1391 = vmatprep.subr.mxu0 0.0
        %1392 = vmatpush1.msra.mxu0 0.0
        %1393 = vmatprep.subr.mxu0 0.0
        %1394 = vmatpush1.msra.mxu0 0.0
        %1395 = vmatprep.subr.mxu0 0.0
        %1396 = vmatpush1.msra.mxu0 0.0
        %1397 = vmatprep.subr.mxu0 0.0
        %1398 = vmatpush1.msra.mxu0 0.0
        %1399 = vmatprep.subr.mxu0 0.0
        %1400 = vmatpush1.msra.mxu0 0.0
        %1401 = vmatprep.subr.mxu0 0.0
        %1402 = vmatpush1.msra.mxu0 0.0
        %1403 = vmatprep.subr.mxu0 %v1252
        %1404 = vmatpush1.msra.mxu0 %v1251
        %1405 = vmatprep.subr.mxu0 %v1244
        %1406 = vmatpush1.msra.mxu0 %v1243
        %1407 = vmatprep.subr.mxu0 %v1236
        %1408 = vmatpush1.msra.mxu0 %v1235
        %1409 = vmatprep.subr.mxu0 %v1228
        %1410 = vmatpush1.msra.mxu0 %v1227
        %1411 = vmatprep.subr.mxu0 0.0
        %1412 = vmatpush2.msra.mxu0 0.0
        %1413 = vmatprep.subr.mxu0 0.0
        %1414 = vmatpush2.msra.mxu0 0.0
        %1415 = vmatprep.subr.mxu0 0.0
        %1416 = vmatpush2.msra.mxu0 0.0
        %1417 = vmatprep.subr.mxu0 0.0
        %1418 = vmatpush2.msra.mxu0 0.0
        %1419 = vmatprep.subr.mxu0 0.0
        %1420 = vmatpush2.msra.mxu0 0.0
        %1421 = vmatprep.subr.mxu0 0.0
        %1422 = vmatpush2.msra.mxu0 0.0
        %1423 = vmatprep.subr.mxu0 0.0
        %1424 = vmatpush2.msra.mxu0 0.0
        %1425 = vmatprep.subr.mxu0 0.0
        %1426 = vmatpush2.msra.mxu0 0.0
        %1427 = vmatprep.subr.mxu0 0.0
        %1428 = vmatpush2.msra.mxu0 0.0
        %1429 = vmatprep.subr.mxu0 0.0
        %1430 = vmatpush2.msra.mxu0 0.0
        %1431 = vmatprep.subr.mxu0 0.0
        %1432 = vmatpush2.msra.mxu0 0.0
        %1433 = vmatprep.subr.mxu0 0.0
        %1434 = vmatpush2.msra.mxu0 0.0
        %1435 = vmatprep.subr.mxu0 0.0
        %1436 = vmatpush2.msra.mxu0 0.0
        %1437 = vmatprep.subr.mxu0 0.0
        %1438 = vmatpush2.msra.mxu0 0.0
        %1439 = vmatprep.subr.mxu0 0.0
        %1440 = vmatpush2.msra.mxu0 0.0
        %1441 = vmatprep.subr.mxu0 0.0
        %1442 = vmatpush2.msra.mxu0 0.0
        %1443 = vmatprep.mubr.f32.mxu0 0.0
        %1444 = vmatmul.mubr.f32.gmra.mxu0 %v1279
        %v1445 = vpop.f32.mrf.mxu0
        %v1446 = vadd.f32 %v1260, %v1445
        %v1447 = vpop.f32.mrf.mxu0
        %v1448 = vadd.f32 %v1260, %v1447
        %1449 = vmatprep.mubr.f32.mxu0 0.0
        %1450 = vmatmul.mubr.f32.gmra.mxu0 %v1282
        %v1451 = vpop.f32.mrf.mxu0
        %v1452 = vadd.f32 %v1265, %v1451
        %v1453 = vpop.f32.mrf.mxu0
        %v1454 = vadd.f32 %v1265, %v1453
        %1455 = vmatprep.mubr.f32.mxu0 0.0
        %1456 = vmatmul.mubr.f32.gmra.mxu0 %v1285
        %v1457 = vpop.f32.mrf.mxu0
        %v1458 = vadd.f32 %v1270, %v1457
        %v1459 = vpop.f32.mrf.mxu0
        %v1460 = vadd.f32 %v1270, %v1459
        %1461 = vmatprep.mubr.f32.mxu0 0.0
        %1462 = vmatmul.mubr.f32.gmra.mxu0 %v1288
        %v1463 = vpop.f32.mrf.mxu0
        %v1464 = vadd.f32 %v1275, %v1463
        %v1465 = vpop.f32.mrf.mxu0
        %v1466 = vadd.f32 %v1275, %v1465
        %1467 = vdwg.mxu0
        %1468 = vmatprep.subr.mxu0 0.0
        %1469 = vmatpush1.msra.mxu0 0.0
        %1470 = vmatprep.subr.mxu0 0.0
        %1471 = vmatpush1.msra.mxu0 0.0
        %1472 = vmatprep.subr.mxu0 0.0
        %1473 = vmatpush1.msra.mxu0 0.0
        %1474 = vmatprep.subr.mxu0 0.0
        %1475 = vmatpush1.msra.mxu0 0.0
        %1476 = vmatprep.subr.mxu0 0.0
        %1477 = vmatpush1.msra.mxu0 0.0
        %1478 = vmatprep.subr.mxu0 0.0
        %1479 = vmatpush1.msra.mxu0 0.0
        %1480 = vmatprep.subr.mxu0 0.0
        %1481 = vmatpush1.msra.mxu0 0.0
        %1482 = vmatprep.subr.mxu0 0.0
        %1483 = vmatpush1.msra.mxu0 0.0
        %1484 = vmatprep.subr.mxu0 0.0
        %1485 = vmatpush1.msra.mxu0 0.0
        %1486 = vmatprep.subr.mxu0 0.0
        %1487 = vmatpush1.msra.mxu0 0.0
        %1488 = vmatprep.subr.mxu0 0.0
        %1489 = vmatpush1.msra.mxu0 0.0
        %1490 = vmatprep.subr.mxu0 0.0
        %1491 = vmatpush1.msra.mxu0 0.0
        %1492 = vmatprep.subr.mxu0 %v1254
        %1493 = vmatpush1.msra.mxu0 %v1253
        %1494 = vmatprep.subr.mxu0 %v1246
        %1495 = vmatpush1.msra.mxu0 %v1245
        %1496 = vmatprep.subr.mxu0 %v1238
        %1497 = vmatpush1.msra.mxu0 %v1237
        %1498 = vmatprep.subr.mxu0 %v1230
        %1499 = vmatpush1.msra.mxu0 %v1229
        %1500 = vmatprep.subr.mxu0 0.0
        %1501 = vmatpush2.msra.mxu0 0.0
        %1502 = vmatprep.subr.mxu0 0.0
        %1503 = vmatpush2.msra.mxu0 0.0
        %1504 = vmatprep.subr.mxu0 0.0
        %1505 = vmatpush2.msra.mxu0 0.0
        %1506 = vmatprep.subr.mxu0 0.0
        %1507 = vmatpush2.msra.mxu0 0.0
        %1508 = vmatprep.subr.mxu0 0.0
        %1509 = vmatpush2.msra.mxu0 0.0
        %1510 = vmatprep.subr.mxu0 0.0
        %1511 = vmatpush2.msra.mxu0 0.0
        %1512 = vmatprep.subr.mxu0 0.0
        %1513 = vmatpush2.msra.mxu0 0.0
        %1514 = vmatprep.subr.mxu0 0.0
        %1515 = vmatpush2.msra.mxu0 0.0
        %1516 = vmatprep.subr.mxu0 0.0
        %1517 = vmatpush2.msra.mxu0 0.0
        %1518 = vmatprep.subr.mxu0 0.0
        %1519 = vmatpush2.msra.mxu0 0.0
        %1520 = vmatprep.subr.mxu0 0.0
        %1521 = vmatpush2.msra.mxu0 0.0
        %1522 = vmatprep.subr.mxu0 0.0
        %1523 = vmatpush2.msra.mxu0 0.0
        %1524 = vmatprep.subr.mxu0 0.0
        %1525 = vmatpush2.msra.mxu0 0.0
        %1526 = vmatprep.subr.mxu0 0.0
        %1527 = vmatpush2.msra.mxu0 0.0
        %1528 = vmatprep.subr.mxu0 0.0
        %1529 = vmatpush2.msra.mxu0 0.0
        %1530 = vmatprep.subr.mxu0 0.0
        %1531 = vmatpush2.msra.mxu0 0.0
        %1532 = vmatprep.mubr.f32.mxu0 0.0
        %1533 = vmatmul.mubr.f32.gmra.mxu0 %v1279
        %v1534 = vpop.f32.mrf.mxu0
        %v1535 = vadd.f32 %v1260, %v1534
        %v1536 = vpop.f32.mrf.mxu0
        %v1537 = vadd.f32 %v1260, %v1536
        %1538 = vmatprep.mubr.f32.mxu0 0.0
        %1539 = vmatmul.mubr.f32.gmra.mxu0 %v1282
        %v1540 = vpop.f32.mrf.mxu0
        %v1541 = vadd.f32 %v1265, %v1540
        %v1542 = vpop.f32.mrf.mxu0
        %v1543 = vadd.f32 %v1265, %v1542
        %1544 = vmatprep.mubr.f32.mxu0 0.0
        %1545 = vmatmul.mubr.f32.gmra.mxu0 %v1285
        %v1546 = vpop.f32.mrf.mxu0
        %v1547 = vadd.f32 %v1270, %v1546
        %v1548 = vpop.f32.mrf.mxu0
        %v1549 = vadd.f32 %v1270, %v1548
        %1550 = vmatprep.mubr.f32.mxu0 0.0
        %1551 = vmatmul.mubr.f32.gmra.mxu0 %v1288
        %v1552 = vpop.f32.mrf.mxu0
        %v1553 = vadd.f32 %v1275, %v1552
        %v1554 = vpop.f32.mrf.mxu0
        %v1555 = vadd.f32 %v1275, %v1554
        %1556 = vdwg.mxu0
        %1557 = vmatprep.subr.mxu0 0.0
        %1558 = vmatpush1.msra.mxu0 0.0
        %1559 = vmatprep.subr.mxu0 0.0
        %1560 = vmatpush1.msra.mxu0 0.0
        %1561 = vmatprep.subr.mxu0 0.0
        %1562 = vmatpush1.msra.mxu0 0.0
        %1563 = vmatprep.subr.mxu0 0.0
        %1564 = vmatpush1.msra.mxu0 0.0
        %1565 = vmatprep.subr.mxu0 0.0
        %1566 = vmatpush1.msra.mxu0 0.0
        %1567 = vmatprep.subr.mxu0 0.0
        %1568 = vmatpush1.msra.mxu0 0.0
        %1569 = vmatprep.subr.mxu0 0.0
        %1570 = vmatpush1.msra.mxu0 0.0
        %1571 = vmatprep.subr.mxu0 0.0
        %1572 = vmatpush1.msra.mxu0 0.0
        %1573 = vmatprep.subr.mxu0 0.0
        %1574 = vmatpush1.msra.mxu0 0.0
        %1575 = vmatprep.subr.mxu0 0.0
        %1576 = vmatpush1.msra.mxu0 0.0
        %1577 = vmatprep.subr.mxu0 0.0
        %1578 = vmatpush1.msra.mxu0 0.0
        %1579 = vmatprep.subr.mxu0 0.0
        %1580 = vmatpush1.msra.mxu0 0.0
        %1581 = vmatprep.subr.mxu0 %v1256
        %1582 = vmatpush1.msra.mxu0 %v1255
        %1583 = vmatprep.subr.mxu0 %v1248
        %1584 = vmatpush1.msra.mxu0 %v1247
        %1585 = vmatprep.subr.mxu0 %v1240
        %1586 = vmatpush1.msra.mxu0 %v1239
        %1587 = vmatprep.subr.mxu0 %v1232
        %1588 = vmatpush1.msra.mxu0 %v1231
        %1589 = vmatprep.subr.mxu0 0.0
        %1590 = vmatpush2.msra.mxu0 0.0
        %1591 = vmatprep.subr.mxu0 0.0
        %1592 = vmatpush2.msra.mxu0 0.0
        %1593 = vmatprep.subr.mxu0 0.0
        %1594 = vmatpush2.msra.mxu0 0.0
        %1595 = vmatprep.subr.mxu0 0.0
        %1596 = vmatpush2.msra.mxu0 0.0
        %1597 = vmatprep.subr.mxu0 0.0
        %1598 = vmatpush2.msra.mxu0 0.0
        %1599 = vmatprep.subr.mxu0 0.0
        %1600 = vmatpush2.msra.mxu0 0.0
        %1601 = vmatprep.subr.mxu0 0.0
        %1602 = vmatpush2.msra.mxu0 0.0
        %1603 = vmatprep.subr.mxu0 0.0
        %1604 = vmatpush2.msra.mxu0 0.0
        %1605 = vmatprep.subr.mxu0 0.0
        %1606 = vmatpush2.msra.mxu0 0.0
        %1607 = vmatprep.subr.mxu0 0.0
        %1608 = vmatpush2.msra.mxu0 0.0
        %1609 = vmatprep.subr.mxu0 0.0
        %1610 = vmatpush2.msra.mxu0 0.0
        %1611 = vmatprep.subr.mxu0 0.0
        %1612 = vmatpush2.msra.mxu0 0.0
        %1613 = vmatprep.subr.mxu0 0.0
        %1614 = vmatpush2.msra.mxu0 0.0
        %1615 = vmatprep.subr.mxu0 0.0
        %1616 = vmatpush2.msra.mxu0 0.0
        %1617 = vmatprep.subr.mxu0 0.0
        %1618 = vmatpush2.msra.mxu0 0.0
        %1619 = vmatprep.subr.mxu0 0.0
        %1620 = vmatpush2.msra.mxu0 0.0
        %1621 = vmatprep.mubr.f32.mxu0 0.0
        %1622 = vmatmul.mubr.f32.gmra.mxu0 %v1279
        %v1623 = vpop.f32.mrf.mxu0
        %v1624 = vadd.f32 %v1260, %v1623
        %v1625 = vpop.f32.mrf.mxu0
        %v1626 = vadd.f32 %v1260, %v1625
        %1627 = vmatprep.mubr.f32.mxu0 0.0
        %1628 = vmatmul.mubr.f32.gmra.mxu0 %v1282
        %v1629 = vpop.f32.mrf.mxu0
        %v1630 = vadd.f32 %v1265, %v1629
        %v1631 = vpop.f32.mrf.mxu0
        %v1632 = vadd.f32 %v1265, %v1631
        %1633 = vmatprep.mubr.f32.mxu0 0.0
        %1634 = vmatmul.mubr.f32.gmra.mxu0 %v1285
        %v1635 = vpop.f32.mrf.mxu0
        %v1636 = vadd.f32 %v1270, %v1635
        %v1637 = vpop.f32.mrf.mxu0
        %v1638 = vadd.f32 %v1270, %v1637
        %1639 = vmatprep.mubr.f32.mxu0 0.0
        %1640 = vmatmul.mubr.f32.gmra.mxu0 %v1288
        %v1641 = vpop.f32.mrf.mxu0
        %v1642 = vadd.f32 %v1275, %v1641
        %v1643 = vpop.f32.mrf.mxu0
        %v1644 = vadd.f32 %v1275, %v1643
        %1645 = vdwg.mxu0
        %v1646 = vmax.f32 %v1357, 0.0
        %v1647 = vmax.f32 %v1359, 0.0
        %v1648 = vmax.f32 %v1446, 0.0
        %v1649 = vmax.f32 %v1448, 0.0
        %v1650 = vmax.f32 %v1535, 0.0
        %v1651 = vmax.f32 %v1537, 0.0
        %v1652 = vmax.f32 %v1624, 0.0
        %v1653 = vmax.f32 %v1626, 0.0
        %v1654 = vmax.f32 %v1363, 0.0
        %v1655 = vmax.f32 %v1365, 0.0
        %v1656 = vmax.f32 %v1452, 0.0
        %v1657 = vmax.f32 %v1454, 0.0
        %v1658 = vmax.f32 %v1541, 0.0
        %v1659 = vmax.f32 %v1543, 0.0
        %v1660 = vmax.f32 %v1630, 0.0
        %v1661 = vmax.f32 %v1632, 0.0
        %v1662 = vmax.f32 %v1369, 0.0
        %v1663 = vmax.f32 %v1371, 0.0
        %v1664 = vmax.f32 %v1458, 0.0
        %v1665 = vmax.f32 %v1460, 0.0
        %v1666 = vmax.f32 %v1547, 0.0
        %v1667 = vmax.f32 %v1549, 0.0
        %v1668 = vmax.f32 %v1636, 0.0
        %v1669 = vmax.f32 %v1638, 0.0
        %v1670 = vmax.f32 %v1375, 0.0
        %v1671 = vmax.f32 %v1377, 0.0
        %v1672 = vmax.f32 %v1464, 0.0
        %v1673 = vmax.f32 %v1466, 0.0
        %v1674 = vmax.f32 %v1553, 0.0
        %v1675 = vmax.f32 %v1555, 0.0
        %v1676 = vmax.f32 %v1642, 0.0
        %v1677 = vmax.f32 %v1644, 0.0
        %1679 = vset.pattern.permute.xlu0 0
        %1680 = vperm.xlu0 %1679, %v703
        %v1681 = vpop.permute.xlu0 %1680
        %v1684 = vsel %vm1277, %v702, 0
        %1686 = vmatprep.subr.mxu0 0.0
        %1687 = vmatpush1.msra.mxu0 0.0
        %1688 = vmatprep.subr.mxu0 0.0
        %1689 = vmatpush1.msra.mxu0 0.0
        %1690 = vmatprep.subr.mxu0 0.0
        %1691 = vmatpush1.msra.mxu0 0.0
        %1692 = vmatprep.subr.mxu0 0.0
        %1693 = vmatpush1.msra.mxu0 0.0
        %1694 = vmatprep.subr.mxu0 0.0
        %1695 = vmatpush1.msra.mxu0 0.0
        %1696 = vmatprep.subr.mxu0 0.0
        %1697 = vmatpush1.msra.mxu0 0.0
        %1698 = vmatprep.subr.mxu0 0.0
        %1699 = vmatpush1.msra.mxu0 0.0
        %1700 = vmatprep.subr.mxu0 0.0
        %1701 = vmatpush1.msra.mxu0 0.0
        %1702 = vmatprep.subr.mxu0 0.0
        %1703 = vmatpush1.msra.mxu0 0.0
        %1704 = vmatprep.subr.mxu0 0.0
        %1705 = vmatpush1.msra.mxu0 0.0
        %1706 = vmatprep.subr.mxu0 0.0
        %1707 = vmatpush1.msra.mxu0 0.0
        %1708 = vmatprep.subr.mxu0 0.0
        %1709 = vmatpush1.msra.mxu0 0.0
        %1710 = vmatprep.subr.mxu0 %v1671
        %1711 = vmatpush1.msra.mxu0 %v1670
        %1712 = vmatprep.subr.mxu0 %v1663
        %1713 = vmatpush1.msra.mxu0 %v1662
        %1714 = vmatprep.subr.mxu0 %v1655
        %1715 = vmatpush1.msra.mxu0 %v1654
        %1716 = vmatprep.subr.mxu0 %v1647
        %1717 = vmatpush1.msra.mxu0 %v1646
        %1718 = vmatprep.subr.mxu0 0.0
        %1719 = vmatpush2.msra.mxu0 0.0
        %1720 = vmatprep.subr.mxu0 0.0
        %1721 = vmatpush2.msra.mxu0 0.0
        %1722 = vmatprep.subr.mxu0 0.0
        %1723 = vmatpush2.msra.mxu0 0.0
        %1724 = vmatprep.subr.mxu0 0.0
        %1725 = vmatpush2.msra.mxu0 0.0
        %1726 = vmatprep.subr.mxu0 0.0
        %1727 = vmatpush2.msra.mxu0 0.0
        %1728 = vmatprep.subr.mxu0 0.0
        %1729 = vmatpush2.msra.mxu0 0.0
        %1730 = vmatprep.subr.mxu0 0.0
        %1731 = vmatpush2.msra.mxu0 0.0
        %1732 = vmatprep.subr.mxu0 0.0
        %1733 = vmatpush2.msra.mxu0 0.0
        %1734 = vmatprep.subr.mxu0 0.0
        %1735 = vmatpush2.msra.mxu0 0.0
        %1736 = vmatprep.subr.mxu0 0.0
        %1737 = vmatpush2.msra.mxu0 0.0
        %1738 = vmatprep.subr.mxu0 0.0
        %1739 = vmatpush2.msra.mxu0 0.0
        %1740 = vmatprep.subr.mxu0 0.0
        %1741 = vmatpush2.msra.mxu0 0.0
        %1742 = vmatprep.subr.mxu0 0.0
        %1743 = vmatpush2.msra.mxu0 0.0
        %1744 = vmatprep.subr.mxu0 0.0
        %1745 = vmatpush2.msra.mxu0 0.0
        %1746 = vmatprep.subr.mxu0 0.0
        %1747 = vmatpush2.msra.mxu0 0.0
        %1748 = vmatprep.subr.mxu0 0.0
        %1749 = vmatpush2.msra.mxu0 0.0
        %1750 = vmatprep.mubr.f32.mxu0 0.0
        %1751 = vmatmul.mubr.f32.gmra.mxu0 %v1684
        %v1752 = vpop.f32.mrf.mxu0
        %v1753 = vadd.f32 %v1681, %v1752
        %v1754 = vpop.f32.mrf.mxu0
        %v1755 = vadd.f32 %v1681, %v1754
        %1756 = vdwg.mxu0
        %1757 = vmatprep.subr.mxu0 0.0
        %1758 = vmatpush1.msra.mxu0 0.0
        %1759 = vmatprep.subr.mxu0 0.0
        %1760 = vmatpush1.msra.mxu0 0.0
        %1761 = vmatprep.subr.mxu0 0.0
        %1762 = vmatpush1.msra.mxu0 0.0
        %1763 = vmatprep.subr.mxu0 0.0
        %1764 = vmatpush1.msra.mxu0 0.0
        %1765 = vmatprep.subr.mxu0 0.0
        %1766 = vmatpush1.msra.mxu0 0.0
        %1767 = vmatprep.subr.mxu0 0.0
        %1768 = vmatpush1.msra.mxu0 0.0
        %1769 = vmatprep.subr.mxu0 0.0
        %1770 = vmatpush1.msra.mxu0 0.0
        %1771 = vmatprep.subr.mxu0 0.0
        %1772 = vmatpush1.msra.mxu0 0.0
        %1773 = vmatprep.subr.mxu0 0.0
        %1774 = vmatpush1.msra.mxu0 0.0
        %1775 = vmatprep.subr.mxu0 0.0
        %1776 = vmatpush1.msra.mxu0 0.0
        %1777 = vmatprep.subr.mxu0 0.0
        %1778 = vmatpush1.msra.mxu0 0.0
        %1779 = vmatprep.subr.mxu0 0.0
        %1780 = vmatpush1.msra.mxu0 0.0
        %1781 = vmatprep.subr.mxu0 %v1673
        %1782 = vmatpush1.msra.mxu0 %v1672
        %1783 = vmatprep.subr.mxu0 %v1665
        %1784 = vmatpush1.msra.mxu0 %v1664
        %1785 = vmatprep.subr.mxu0 %v1657
        %1786 = vmatpush1.msra.mxu0 %v1656
        %1787 = vmatprep.subr.mxu0 %v1649
        %1788 = vmatpush1.msra.mxu0 %v1648
        %1789 = vmatprep.subr.mxu0 0.0
        %1790 = vmatpush2.msra.mxu0 0.0
        %1791 = vmatprep.subr.mxu0 0.0
        %1792 = vmatpush2.msra.mxu0 0.0
        %1793 = vmatprep.subr.mxu0 0.0
        %1794 = vmatpush2.msra.mxu0 0.0
        %1795 = vmatprep.subr.mxu0 0.0
        %1796 = vmatpush2.msra.mxu0 0.0
        %1797 = vmatprep.subr.mxu0 0.0
        %1798 = vmatpush2.msra.mxu0 0.0
        %1799 = vmatprep.subr.mxu0 0.0
        %1800 = vmatpush2.msra.mxu0 0.0
        %1801 = vmatprep.subr.mxu0 0.0
        %1802 = vmatpush2.msra.mxu0 0.0
        %1803 = vmatprep.subr.mxu0 0.0
        %1804 = vmatpush2.msra.mxu0 0.0
        %1805 = vmatprep.subr.mxu0 0.0
        %1806 = vmatpush2.msra.mxu0 0.0
        %1807 = vmatprep.subr.mxu0 0.0
        %1808 = vmatpush2.msra.mxu0 0.0
        %1809 = vmatprep.subr.mxu0 0.0
        %1810 = vmatpush2.msra.mxu0 0.0
        %1811 = vmatprep.subr.mxu0 0.0
        %1812 = vmatpush2.msra.mxu0 0.0
        %1813 = vmatprep.subr.mxu0 0.0
        %1814 = vmatpush2.msra.mxu0 0.0
        %1815 = vmatprep.subr.mxu0 0.0
        %1816 = vmatpush2.msra.mxu0 0.0
        %1817 = vmatprep.subr.mxu0 0.0
        %1818 = vmatpush2.msra.mxu0 0.0
        %1819 = vmatprep.subr.mxu0 0.0
        %1820 = vmatpush2.msra.mxu0 0.0
        %1821 = vmatprep.mubr.f32.mxu0 0.0
        %1822 = vmatmul.mubr.f32.gmra.mxu0 %v1684
        %v1823 = vpop.f32.mrf.mxu0
        %v1824 = vadd.f32 %v1681, %v1823
        %v1825 = vpop.f32.mrf.mxu0
        %v1826 = vadd.f32 %v1681, %v1825
        %1827 = vdwg.mxu0
        %1828 = vmatprep.subr.mxu0 0.0
        %1829 = vmatpush1.msra.mxu0 0.0
        %1830 = vmatprep.subr.mxu0 0.0
        %1831 = vmatpush1.msra.mxu0 0.0
        %1832 = vmatprep.subr.mxu0 0.0
        %1833 = vmatpush1.msra.mxu0 0.0
        %1834 = vmatprep.subr.mxu0 0.0
        %1835 = vmatpush1.msra.mxu0 0.0
        %1836 = vmatprep.subr.mxu0 0.0
        %1837 = vmatpush1.msra.mxu0 0.0
        %1838 = vmatprep.subr.mxu0 0.0
        %1839 = vmatpush1.msra.mxu0 0.0
        %1840 = vmatprep.subr.mxu0 0.0
        %1841 = vmatpush1.msra.mxu0 0.0
        %1842 = vmatprep.subr.mxu0 0.0
        %1843 = vmatpush1.msra.mxu0 0.0
        %1844 = vmatprep.subr.mxu0 0.0
        %1845 = vmatpush1.msra.mxu0 0.0
        %1846 = vmatprep.subr.mxu0 0.0
        %1847 = vmatpush1.msra.mxu0 0.0
        %1848 = vmatprep.subr.mxu0 0.0
        %1849 = vmatpush1.msra.mxu0 0.0
        %1850 = vmatprep.subr.mxu0 0.0
        %1851 = vmatpush1.msra.mxu0 0.0
        %1852 = vmatprep.subr.mxu0 %v1675
        %1853 = vmatpush1.msra.mxu0 %v1674
        %1854 = vmatprep.subr.mxu0 %v1667
        %1855 = vmatpush1.msra.mxu0 %v1666
        %1856 = vmatprep.subr.mxu0 %v1659
        %1857 = vmatpush1.msra.mxu0 %v1658
        %1858 = vmatprep.subr.mxu0 %v1651
        %1859 = vmatpush1.msra.mxu0 %v1650
        %1860 = vmatprep.subr.mxu0 0.0
        %1861 = vmatpush2.msra.mxu0 0.0
        %1862 = vmatprep.subr.mxu0 0.0
        %1863 = vmatpush2.msra.mxu0 0.0
        %1864 = vmatprep.subr.mxu0 0.0
        %1865 = vmatpush2.msra.mxu0 0.0
        %1866 = vmatprep.subr.mxu0 0.0
        %1867 = vmatpush2.msra.mxu0 0.0
        %1868 = vmatprep.subr.mxu0 0.0
        %1869 = vmatpush2.msra.mxu0 0.0
        %1870 = vmatprep.subr.mxu0 0.0
        %1871 = vmatpush2.msra.mxu0 0.0
        %1872 = vmatprep.subr.mxu0 0.0
        %1873 = vmatpush2.msra.mxu0 0.0
        %1874 = vmatprep.subr.mxu0 0.0
        %1875 = vmatpush2.msra.mxu0 0.0
        %1876 = vmatprep.subr.mxu0 0.0
        %1877 = vmatpush2.msra.mxu0 0.0
        %1878 = vmatprep.subr.mxu0 0.0
        %1879 = vmatpush2.msra.mxu0 0.0
        %1880 = vmatprep.subr.mxu0 0.0
        %1881 = vmatpush2.msra.mxu0 0.0
        %1882 = vmatprep.subr.mxu0 0.0
        %1883 = vmatpush2.msra.mxu0 0.0
        %1884 = vmatprep.subr.mxu0 0.0
        %1885 = vmatpush2.msra.mxu0 0.0
        %1886 = vmatprep.subr.mxu0 0.0
        %1887 = vmatpush2.msra.mxu0 0.0
        %1888 = vmatprep.subr.mxu0 0.0
        %1889 = vmatpush2.msra.mxu0 0.0
        %1890 = vmatprep.subr.mxu0 0.0
        %1891 = vmatpush2.msra.mxu0 0.0
        %1892 = vmatprep.mubr.f32.mxu0 0.0
        %1893 = vmatmul.mubr.f32.gmra.mxu0 %v1684
        %v1894 = vpop.f32.mrf.mxu0
        %v1895 = vadd.f32 %v1681, %v1894
        %v1896 = vpop.f32.mrf.mxu0
        %v1897 = vadd.f32 %v1681, %v1896
        %1898 = vdwg.mxu0
        %1899 = vmatprep.subr.mxu0 0.0
        %1900 = vmatpush1.msra.mxu0 0.0
        %1901 = vmatprep.subr.mxu0 0.0
        %1902 = vmatpush1.msra.mxu0 0.0
        %1903 = vmatprep.subr.mxu0 0.0
        %1904 = vmatpush1.msra.mxu0 0.0
        %1905 = vmatprep.subr.mxu0 0.0
        %1906 = vmatpush1.msra.mxu0 0.0
        %1907 = vmatprep.subr.mxu0 0.0
        %1908 = vmatpush1.msra.mxu0 0.0
        %1909 = vmatprep.subr.mxu0 0.0
        %1910 = vmatpush1.msra.mxu0 0.0
        %1911 = vmatprep.subr.mxu0 0.0
        %1912 = vmatpush1.msra.mxu0 0.0
        %1913 = vmatprep.subr.mxu0 0.0
        %1914 = vmatpush1.msra.mxu0 0.0
        %1915 = vmatprep.subr.mxu0 0.0
        %1916 = vmatpush1.msra.mxu0 0.0
        %1917 = vmatprep.subr.mxu0 0.0
        %1918 = vmatpush1.msra.mxu0 0.0
        %1919 = vmatprep.subr.mxu0 0.0
        %1920 = vmatpush1.msra.mxu0 0.0
        %1921 = vmatprep.subr.mxu0 0.0
        %1922 = vmatpush1.msra.mxu0 0.0
        %1923 = vmatprep.subr.mxu0 %v1677
        %1924 = vmatpush1.msra.mxu0 %v1676
        %1925 = vmatprep.subr.mxu0 %v1669
        %1926 = vmatpush1.msra.mxu0 %v1668
        %1927 = vmatprep.subr.mxu0 %v1661
        %1928 = vmatpush1.msra.mxu0 %v1660
        %1929 = vmatprep.subr.mxu0 %v1653
        %1930 = vmatpush1.msra.mxu0 %v1652
        %1931 = vmatprep.subr.mxu0 0.0
        %1932 = vmatpush2.msra.mxu0 0.0
        %1933 = vmatprep.subr.mxu0 0.0
        %1934 = vmatpush2.msra.mxu0 0.0
        %1935 = vmatprep.subr.mxu0 0.0
        %1936 = vmatpush2.msra.mxu0 0.0
        %1937 = vmatprep.subr.mxu0 0.0
        %1938 = vmatpush2.msra.mxu0 0.0
        %1939 = vmatprep.subr.mxu0 0.0
        %1940 = vmatpush2.msra.mxu0 0.0
        %1941 = vmatprep.subr.mxu0 0.0
        %1942 = vmatpush2.msra.mxu0 0.0
        %1943 = vmatprep.subr.mxu0 0.0
        %1944 = vmatpush2.msra.mxu0 0.0
        %1945 = vmatprep.subr.mxu0 0.0
        %1946 = vmatpush2.msra.mxu0 0.0
        %1947 = vmatprep.subr.mxu0 0.0
        %1948 = vmatpush2.msra.mxu0 0.0
        %1949 = vmatprep.subr.mxu0 0.0
        %1950 = vmatpush2.msra.mxu0 0.0
        %1951 = vmatprep.subr.mxu0 0.0
        %1952 = vmatpush2.msra.mxu0 0.0
        %1953 = vmatprep.subr.mxu0 0.0
        %1954 = vmatpush2.msra.mxu0 0.0
        %1955 = vmatprep.subr.mxu0 0.0
        %1956 = vmatpush2.msra.mxu0 0.0
        %1957 = vmatprep.subr.mxu0 0.0
        %1958 = vmatpush2.msra.mxu0 0.0
        %1959 = vmatprep.subr.mxu0 0.0
        %1960 = vmatpush2.msra.mxu0 0.0
        %1961 = vmatprep.subr.mxu0 0.0
        %1962 = vmatpush2.msra.mxu0 0.0
        %1963 = vmatprep.mubr.f32.mxu0 0.0
        %1964 = vmatmul.mubr.f32.gmra.mxu0 %v1684
        %v1965 = vpop.f32.mrf.mxu0
        %v1966 = vadd.f32 %v1681, %v1965
        %v1967 = vpop.f32.mrf.mxu0
        %v1968 = vadd.f32 %v1681, %v1967
        %1969 = vdwg.mxu0
        %v1970 = vxor.u32 %v1753, 2147483648
        %v1971 = vxor.u32 %v1755, 2147483648
        %v1972 = vxor.u32 %v1824, 2147483648
        %v1973 = vxor.u32 %v1826, 2147483648
        %v1974 = vxor.u32 %v1895, 2147483648
        %v1975 = vxor.u32 %v1897, 2147483648
        %v1976 = vxor.u32 %v1966, 2147483648
        %v1977 = vxor.u32 %v1968, 2147483648
        %v1978 = vmul.f32 %v1970, 1.442695
        %v1979 = vpow.pop %v1978
        %v1980 = vmul.f32 %v1971, 1.442695
        %v1981 = vpow.pop %v1980
        %v1982 = vmul.f32 %v1972, 1.442695
        %v1983 = vpow.pop %v1982
        %v1984 = vmul.f32 %v1973, 1.442695
        %v1985 = vpow.pop %v1984
        %v1986 = vmul.f32 %v1974, 1.442695
        %v1987 = vpow.pop %v1986
        %v1988 = vmul.f32 %v1975, 1.442695
        %v1989 = vpow.pop %v1988
        %v1990 = vmul.f32 %v1976, 1.442695
        %v1991 = vpow.pop %v1990
        %v1992 = vmul.f32 %v1977, 1.442695
        %v1993 = vpow.pop %v1992
        %v1994 = vadd.f32 %v1979, 1.0
        %v1995 = vadd.f32 %v1981, 1.0
        %v1996 = vadd.f32 %v1983, 1.0
        %v1997 = vadd.f32 %v1985, 1.0
        %v1998 = vadd.f32 %v1987, 1.0
        %v1999 = vadd.f32 %v1989, 1.0
        %v2000 = vadd.f32 %v1991, 1.0
        %v2001 = vadd.f32 %v1993, 1.0
        %v2002 = vrcp.pop %v1994
        %v2003 = vmul.f32 1.0, %v2002
        %v2004 = vrcp.pop %v1995
        %v2005 = vmul.f32 1.0, %v2004
        %v2006 = vrcp.pop %v1996
        %v2007 = vmul.f32 1.0, %v2006
        %v2008 = vrcp.pop %v1997
        %v2009 = vmul.f32 1.0, %v2008
        %v2010 = vrcp.pop %v1998
        %v2011 = vmul.f32 1.0, %v2010
        %v2012 = vrcp.pop %v1999
        %v2013 = vmul.f32 1.0, %v2012
        %v2014 = vrcp.pop %v2000
        %v2015 = vmul.f32 1.0, %v2014
        %v2016 = vrcp.pop %v2001
        %v2017 = vmul.f32 1.0, %v2016
        %v2018 = vld [vmem:[#allocation2] sm:$0xff]
        %v2019 = vmul.f32 %v2003, %v678
        %v2020 = vmul.f32 %v2005, %v679
        %v2021 = vmul.f32 %v2007, %v680
        %v2022 = vmul.f32 %v2009, %v681
        %v2023 = vmul.f32 %v2011, %v682
        %v2024 = vmul.f32 %v2013, %v683
        %v2025 = vmul.f32 %v2015, %v684
        %v2026 = vmul.f32 %v2017, %v685
        %v2027 = vadd.f32 %v2019, %v2020
        %v2028 = vadd.f32 %v2027, %v2021
        %v2029 = vadd.f32 %v2028, %v2022
        %v2030 = vadd.f32 %v2029, %v2023
        %v2031 = vadd.f32 %v2030, %v2024
        %v2032 = vadd.f32 %v2031, %v2025
        %v2033 = vadd.f32 %v2032, %v2026
        %2034 = vadd.xlane.f32.xlu0 %v2033
        %v2035 = vpop.xlane.xlu0 %2034
        %v2036 = vadd.f32 %v2018, %v2035
        %vm2037 = vcmask 7168
        %2038 = vst.msk [vmem:[#allocation2] sm:$0xff] %vm2037, %v2036
        %v2039 = vld [vmem:[#allocation3] sm:$0xff]
        %v2040 = vmul.f32 %v2003, %v2003
        %v2041 = vmul.f32 %v2005, %v2005
        %v2042 = vmul.f32 %v2007, %v2007
        %v2043 = vmul.f32 %v2009, %v2009
        %v2044 = vmul.f32 %v2011, %v2011
        %v2045 = vmul.f32 %v2013, %v2013
        %v2046 = vmul.f32 %v2015, %v2015
        %v2047 = vmul.f32 %v2017, %v2017
        %v2048 = vadd.f32 %v2040, %v2041
        %v2049 = vadd.f32 %v2048, %v2042
        %v2050 = vadd.f32 %v2049, %v2043
        %v2051 = vadd.f32 %v2050, %v2044
        %v2052 = vadd.f32 %v2051, %v2045
        %v2053 = vadd.f32 %v2052, %v2046
        %v2054 = vadd.f32 %v2053, %v2047
        %2055 = vadd.xlane.f32.xlu0 %v2054
        %v2056 = vpop.xlane.xlu0 %2055
        %v2057 = vadd.f32 %v2039, %v2056
        %2058 = vst.msk [vmem:[#allocation3] sm:$0xff] %vm2037, %v2057
        %v2059 = vld [vmem:[#allocation4] sm:$0xff]
        %v2060 = vmul.f32 %v678, %v678
        %v2061 = vmul.f32 %v679, %v679
        %v2062 = vmul.f32 %v680, %v680
        %v2063 = vmul.f32 %v681, %v681
        %v2064 = vmul.f32 %v682, %v682
        %v2065 = vmul.f32 %v683, %v683
        %v2066 = vmul.f32 %v684, %v684
        %v2067 = vmul.f32 %v685, %v685
        %v2068 = vadd.f32 %v2060, %v2061
        %v2069 = vadd.f32 %v2068, %v2062
        %v2070 = vadd.f32 %v2069, %v2063
        %v2071 = vadd.f32 %v2070, %v2064
        %v2072 = vadd.f32 %v2071, %v2065
        %v2073 = vadd.f32 %v2072, %v2066
        %v2074 = vadd.f32 %v2073, %v2067
        %2075 = vadd.xlane.f32.xlu0 %v2074
        %v2076 = vpop.xlane.xlu0 %2075
        %v2077 = vadd.f32 %v2059, %v2076
        %2078 = vst.msk [vmem:[#allocation4] sm:$0xff] %vm2037, %v2077
        // Predicated region
        $region65: #{tpu_custom_call.1} parent=55 // pred_check
          %p2079 = pneg %p666
        $region66: #{tpu_custom_call.1} parent=55 // pred_check_branch
          %2081 = sbr.rel (%p2079) target = $region68
        $region67: #{tpu_custom_call.1} parent=55 // pred_region
          %v2082 = vld [vmem:[%s621] sm:$0xff]
          %v2083 = vld [vmem:[#allocation2] sm:$0xff]
          %v2084 = vmul.f32 %v2083, %v2082
          %v2085 = vsel %vm2037, %v2084, 0.0
          %2086 = vadd.xlane.f32.xlu0 %v2085
          %v2087 = vpop.xlane.xlu0 %2086
          %v2088 = vrot.slane %v2087, 4
          %v2089 = vadd.f32 %v2087, %v2088
          %v2090 = vrot.slane %v2089, 2
          %v2091 = vadd.f32 %v2089, %v2090
          %v2092 = vrot.slane %v2091, 1
          %v2093 = vadd.f32 %v2091, %v2092
          %s2094 = vtos %v2093
          %v2095 = vstv %s2094
          %vm2096 = vcmask 0
          %2097 = vst.msk [vmem:[%s651] sm:$0x1] %vm2096, %v2095
          %v2098 = vld [vmem:[#allocation3] sm:$0xff]
          %v2099 = vmul.f32 %v2098, %v2082
          %v2100 = vsel %vm2037, %v2099, 0.0
          %2101 = vadd.xlane.f32.xlu0 %v2100
          %v2102 = vpop.xlane.xlu0 %2101
          %v2103 = vrot.slane %v2102, 4
          %v2104 = vadd.f32 %v2102, %v2103
          %v2105 = vrot.slane %v2104, 2
          %v2106 = vadd.f32 %v2104, %v2105
          %v2107 = vrot.slane %v2106, 1
          %v2108 = vadd.f32 %v2106, %v2107
          %s2109 = vtos %v2108
          %v2110 = vstv %s2109
          %2111 = vst.msk [vmem:[%s658] sm:$0x1] %vm2096, %v2110
          %v2112 = vld [vmem:[#allocation4] sm:$0xff]
          %v2113 = vmul.f32 %v2112, %v2082
          %v2114 = vsel %vm2037, %v2113, 0.0
          %2115 = vadd.xlane.f32.xlu0 %v2114
          %v2116 = vpop.xlane.xlu0 %2115
          %v2117 = vrot.slane %v2116, 4
          %v2118 = vadd.f32 %v2116, %v2117
          %v2119 = vrot.slane %v2118, 2
          %v2120 = vadd.f32 %v2118, %v2119
          %v2121 = vrot.slane %v2120, 1
          %v2122 = vadd.f32 %v2120, %v2121
          %s2123 = vtos %v2122
          %v2124 = vstv %s2123
          %2125 = vst.msk [vmem:[%s665] sm:$0x1] %vm2096, %v2124
        $region68: #{tpu_custom_call.1} parent=55 // pred_fallthru
          _
        %p2126 = scmp.lt.s32.totalorder %s31, 0
        %s2127 = scalar_select %p2126, %s31, 0
        %p2128 = scmp.lt.s32.totalorder %s32, 2
        %s2129 = scalar_select %p2128, %s32, 2
        %s2130 = smul.addr %s2127, 3
        %s2131 = sadd.s32 %s2129, %s2130
        %s2132 = scalar_lea.vmem %s9, %s2131
        %p2133 = scmp.lt.s32.totalorder %s31, 0
        %s2134 = scalar_select %p2133, %s31, 0
        %p2135 = scmp.lt.s32.totalorder %s32, 2
        %s2136 = scalar_select %p2135, %s32, 2
        %s2137 = smul.addr %s2134, 3
        %s2138 = sadd.s32 %s2136, %s2137
        %s2139 = scalar_lea.vmem %s10, %s2138
        %p2140 = scmp.lt.s32.totalorder %s31, 0
        %s2141 = scalar_select %p2140, %s31, 0
        %p2142 = scmp.lt.s32.totalorder %s32, 2
        %s2143 = scalar_select %p2142, %s32, 2
        %s2144 = smul.addr %s2141, 3
        %s2145 = sadd.s32 %s2143, %s2144
        %s2146 = scalar_lea.vmem %s11, %s2145
        // Predicated region
        $region69: #{tpu_custom_call.1} parent=55 // pred_check
          %p2147 = pneg %p307
        $region70: #{tpu_custom_call.1} parent=55 // pred_check_branch
          %2149 = sbr.rel (%p2147) target = $region72
        $region71: #{tpu_custom_call.1} parent=55 // pred_region
          _
        $region72: #{tpu_custom_call.1} parent=55 // pred_fallthru
          _
        // Predicated region
        $region73: #{tpu_custom_call.1} parent=55 // pred_check
          %p2150 = pneg %p335
        $region74: #{tpu_custom_call.1} parent=55 // pred_check_branch
          %2152 = sbr.rel (%p2150) target = $region76
        $region75: #{tpu_custom_call.1} parent=55 // pred_region
          _
        $region76: #{tpu_custom_call.1} parent=55 // pred_fallthru
          _
        // Predicated region
        $region77: #{tpu_custom_call.1} parent=55 // pred_check
          %p2153 = pneg %p363
        $region78: #{tpu_custom_call.1} parent=55 // pred_check_branch
          %2155 = sbr.rel (%p2153) target = $region80
        $region79: #{tpu_custom_call.1} parent=55 // pred_region
          _
        $region80: #{tpu_custom_call.1} parent=55 // pred_fallthru
          _
      $region56: #{tpu_custom_call.1} parent=5 // pred_fallthru
        _
      %p2156 = scmp.le.s32.totalorder 2, %s21
      // Predicated region
      $region81: #{tpu_custom_call.1} parent=5 // pred_check
        %p2157 = pneg %p2156
      $region82: #{tpu_custom_call.1} parent=5 // pred_check_branch
        %2159 = sbr.rel (%p2157) target = $region84
      $region83: #{tpu_custom_call.1} parent=5 // pred_region
        %s2160 = ssub.s32 %s21, 2
        // Predicated region
        $region85: #{tpu_custom_call.1} parent=83 // pred_check
          %p2161 = pneg %p313
        $region86: #{tpu_custom_call.1} parent=83 // pred_check_branch
          %2163 = sbr.rel (%p2161) target = $region88
        $region87: #{tpu_custom_call.1} parent=83 // pred_region
          %p2164 = scmp.lt.s32.totalorder %s34, 0
          %s2165 = scalar_select %p2164, %s34, 0
          %p2166 = scmp.lt.s32.totalorder %s35, 2
          %s2167 = scalar_select %p2166, %s35, 2
          %s2168 = smul.addr %s2165, 3
          %s2169 = sadd.s32 %s2167, %s2168
          %s2170 = scalar_lea.vmem %s9, %s2169
        $region88: #{tpu_custom_call.1} parent=83 // pred_fallthru
          _
        // Predicated region
        $region89: #{tpu_custom_call.1} parent=83 // pred_check
          %p2171 = pneg %p341
        $region90: #{tpu_custom_call.1} parent=83 // pred_check_branch
          %2173 = sbr.rel (%p2171) target = $region92
        $region91: #{tpu_custom_call.1} parent=83 // pred_region
          %p2174 = scmp.lt.s32.totalorder %s34, 0
          %s2175 = scalar_select %p2174, %s34, 0
          %p2176 = scmp.lt.s32.totalorder %s35, 2
          %s2177 = scalar_select %p2176, %s35, 2
          %s2178 = smul.addr %s2175, 3
          %s2179 = sadd.s32 %s2177, %s2178
          %s2180 = scalar_lea.vmem %s10, %s2179
        $region92: #{tpu_custom_call.1} parent=83 // pred_fallthru
          _
        // Predicated region
        $region93: #{tpu_custom_call.1} parent=83 // pred_check
          %p2181 = pneg %p369
        $region94: #{tpu_custom_call.1} parent=83 // pred_check_branch
          %2183 = sbr.rel (%p2181) target = $region96
        $region95: #{tpu_custom_call.1} parent=83 // pred_region
          %p2184 = scmp.lt.s32.totalorder %s34, 0
          %s2185 = scalar_select %p2184, %s34, 0
          %p2186 = scmp.lt.s32.totalorder %s35, 2
          %s2187 = scalar_select %p2186, %s35, 2
          %s2188 = smul.addr %s2185, 3
          %s2189 = sadd.s32 %s2187, %s2188
          %s2190 = scalar_lea.vmem %s11, %s2189
        $region96: #{tpu_custom_call.1} parent=83 // pred_fallthru
          _
      $region84: #{tpu_custom_call.1} parent=5 // pred_fallthru
        _
    $region6: #{tpu_custom_call.1} parent=1 // loop_footer
      %s25 = sadd.s32 1, %s21
    $region7: #{tpu_custom_call.1} parent=1 // loop_footer_branch
      %20 = sbr.rel target = $region3
    $region8: #{tpu_custom_call.1} parent=1 // loop_exit
      _
    %2191 = vsyncpa [#allocation6], 1
    %s2192 = scalar_lea.sflag [#allocation6], 1
    %2193 = vsyncpa %s2192, 1

</llo_original>
